<compile_context>
chip_gen: v5e
topology: v5e:2x2
jax: 0.10.0
libtpu: 0.0.40
codegen_flags: <defaults>
</compile_context>

<pallas_src>
import math
from functools import partial

import jax
import jax.numpy as jnp
from jax import lax
from jax.experimental import pallas as pl
from jax.experimental.pallas import tpu as pltpu

LANE = 128


# ----------------------------------------------------------------------------
# Per-generation tuning helpers
# ----------------------------------------------------------------------------
def _vmem_limit_bytes():
    """Scoped-VMEM budget per generation: ~100 MiB on 128-MiB parts (v5e/v6e),
    ~48 MiB on v7x (64 MiB physical).  Conservative fallback if query fails."""
    try:
        cap = pltpu.get_tpu_info().vmem_capacity_bytes
    except Exception:
        cap = 64 * 1024 * 1024
    if cap >= 128 * 1024 * 1024:
        return 100 * 1024 * 1024
    return 48 * 1024 * 1024


def _pick_batch_block(B, S, target_rows=256):
    """Largest divisor of B giving ~target_rows rows (Bb*S) per block; if B
    allows, keep >=2 batch blocks so v7x's second TensorCore gets work."""
    divs = [d for d in range(1, B + 1) if B % d == 0]
    fit = [d for d in divs if d * S <= target_rows] or [divs[0]]
    bb = fit[-1]
    if B // bb < 2:
        smaller = [d for d in divs if B // d >= 2]
        if smaller:
            bb = smaller[-1]
    return bb


def _pick_row_tile(rows, target=512):
    """Row tile for the fc_out matmul: full if small, else a divisor of rows
    near the ~512-row sweet spot (multiple of 8 for sublane alignment)."""
    if rows <= target:
        return rows
    for rt in range(target - target % 8, 7, -8):
        if rows % rt == 0:
            return rt
    for rt in range(target, 0, -1):
        if rows % rt == 0:
            return rt
    return rows


# ----------------------------------------------------------------------------
# Kernels
# ----------------------------------------------------------------------------
def fc_out_kernel(x_ref, wT_ref, b_ref, o_ref):
    """fc_out row tile: (Rt, D) @ (D, F_pad) + b -> lane-dense (Rt, F_pad)."""
    o_ref[...] = (
        jnp.dot(x_ref[...].astype(jnp.bfloat16), wT_ref[...],
                preferred_element_type=jnp.float32)
        + b_ref[...]
    )


def make_layer_kernel(Bb, S, F, D, H, nhead):
    """Fused encoder (layer 0 only) + one nn.TransformerEncoderLayer
    (post-norm, ReLU, eval-mode dropout) for one batch block.

    Called with grid=(B//Bb, L); the output VMEM block (batch-indexed,
    constant across the layer axis) is the resident activation carried from
    layer to layer.
    """
    hd = D // nhead
    scale = 1.0 / math.sqrt(hd)
    eps = 1e-5
    bf16 = jnp.bfloat16

    def layer_kernel(src_ref, pe_ref, enc_wT_ref, enc_b_ref, maskb_ref,
                     in_wT_ref, in_b_ref, out_wT_ref, out_b_ref,
                     ln1w_ref, ln1b_ref,
                     l1wT_ref, l1b_ref, l2wT_ref, l2b_ref,
                     ln2w_ref, ln2b_ref,
                     o_ref):
        layer = pl.program_id(1)

        # ---- fused input encoder: Linear(F->D) + ReLU + positional encoding.
        # Seeds the resident activation on the first layer iteration only.
        @pl.when(layer == 0)
        def _():
            xe = src_ref[...].reshape(Bb * S, F).astype(bf16)
            y = jnp.dot(xe, enc_wT_ref[...],
                        preferred_element_type=jnp.float32) + enc_b_ref[...]
            y = jnp.maximum(y, 0.0).reshape(Bb, S, D)
            o_ref[...] = y + pe_ref[...][None, :, :]

        x3 = o_ref[...]                        # (Bb, S, D) f32, resident
        x2 = x3.reshape(Bb * S, D)

        # ---- fused QKV projection (bf16 MXU, f32 accumulate) -----------------
        qkv = jnp.dot(x2.astype(bf16), in_wT_ref[...],
                      preferred_element_type=jnp.float32) + in_b_ref[...]
        qkv3 = qkv.reshape(Bb, S, 3 * D)       # [q | k | v] along last dim

        # Key-padding additive bias: broadcast ONCE per layer (not per head).
        bias = jnp.broadcast_to(maskb_ref[...], (Bb, S, S))

        # ---- multi-head attention --------------------------------------------
        # TODO(synk): fold heads into a single 4-D 'bqhd,bkhd->bhqk' einsum once
        # Mosaic dot_general reliably lowers >1 batch dim; the per-head 3-D
        # einsums (single batch dim) used here are the known-good lowering.
        ctx_heads = []
        for h in range(nhead):
            q = qkv3[:, :, h * hd:(h + 1) * hd]                        # (Bb,S,hd)
            k = qkv3[:, :, D + h * hd:D + (h + 1) * hd]
            v = qkv3[:, :, 2 * D + h * hd:2 * D + (h + 1) * hd]

            s = jnp.einsum('bqd,bkd->bqk', q.astype(bf16), k.astype(bf16),
                           preferred_element_type=jnp.float32) * scale
            s = s + bias                                               # (Bb,S,S)
            m = jnp.max(s, axis=-1, keepdims=True)
            e = jnp.exp(s - m)
            p = e * pl.reciprocal(jnp.sum(e, axis=-1, keepdims=True),
                                  approx=True)
            ctx_heads.append(
                jnp.einsum('bqk,bkd->bqd', p.astype(bf16), v.astype(bf16),
                           preferred_element_type=jnp.float32))        # (Bb,S,hd)

        ctx = jnp.concatenate(ctx_heads, axis=-1).reshape(Bb * S, D)

        # single fused out_proj over all heads (contraction depth = D)
        attn = jnp.dot(ctx.astype(bf16), out_wT_ref[...],
                       preferred_element_type=jnp.float32) + out_b_ref[...]

        # ---- residual + LayerNorm1 (f32) --------------------------------------
        y = x2 + attn
        mu = jnp.mean(y, axis=-1, keepdims=True)
        var = jnp.mean((y - mu) ** 2, axis=-1, keepdims=True)
        y = (y - mu) * lax.rsqrt(var + eps) * ln1w_ref[...] + ln1b_ref[...]

        # ---- feed-forward (Linear -> ReLU -> Linear), bf16 MXU ----------------
        ff = jnp.maximum(
            jnp.dot(y.astype(bf16), l1wT_ref[...],
                    preferred_element_type=jnp.float32) + l1b_ref[...], 0.0)
        ff = jnp.dot(ff.astype(bf16), l2wT_ref[...],
                     preferred_element_type=jnp.float32) + l2b_ref[...]

        # ---- residual + LayerNorm2 (f32) --------------------------------------
        z = y + ff
        mu2 = jnp.mean(z, axis=-1, keepdims=True)
        var2 = jnp.mean((z - mu2) ** 2, axis=-1, keepdims=True)
        zn = (z - mu2) * lax.rsqrt(var2 + eps) * ln2w_ref[...] + ln2b_ref[...]

        # carry to next layer; HBM writeback happens when the batch block ends
        o_ref[...] = zn.reshape(Bb, S, D)

    return layer_kernel


# ----------------------------------------------------------------------------
# Parameter init (deterministic, mirrors the nn.Module's shapes)
# ----------------------------------------------------------------------------
def init_params(key, num_feats, d_model, hidden, nlayers):
    def lin(k, out_dim, in_dim):
        kw, kb = jax.random.split(k)
        bound = 1.0 / math.sqrt(in_dim)
        w = jax.random.uniform(kw, (out_dim, in_dim), jnp.float32, -bound, bound)
        b = jax.random.uniform(kb, (1, out_dim), jnp.float32, -bound, bound)
        return w, b

    keys = jax.random.split(key, 2 + nlayers)
    enc_w, enc_b = lin(keys[0], d_model, num_feats)        # encoder Linear
    fc_w, fc_b = lin(keys[1], num_feats, d_model)          # fc_out Linear
    layers = []
    for i in range(nlayers):
        lk = jax.random.split(keys[2 + i], 4)
        in_w, in_b = lin(lk[0], 3 * d_model, d_model)      # attn in_proj
        out_w, out_b = lin(lk[1], d_model, d_model)        # attn out_proj
        l1_w, l1_b = lin(lk[2], hidden, d_model)           # ffn linear1
        l2_w, l2_b = lin(lk[3], d_model, hidden)           # ffn linear2
        layers.append(dict(
            in_w=in_w, in_b=in_b, out_w=out_w, out_b=out_b,
            ln1_w=jnp.ones((1, d_model), jnp.float32),
            ln1_b=jnp.zeros((1, d_model), jnp.float32),
            l1_w=l1_w, l1_b=l1_b, l2_w=l2_w, l2_b=l2_b,
            ln2_w=jnp.ones((1, d_model), jnp.float32),
            ln2_b=jnp.zeros((1, d_model), jnp.float32),
        ))
    return dict(enc_w=enc_w, enc_b=enc_b, fc_w=fc_w, fc_b=fc_b, layers=layers)


def prepare_params(params):
    """One-time prep: transpose + stack per-layer weights, cast matmul weights
    to bf16, and zero-pad the fc_out weight/bias to a 128-lane-dense width."""
    layers = params["layers"]
    F = params["fc_w"].shape[0]                       # num_feats
    F_pad = ((F + LANE - 1) // LANE) * LANE

    fc_wT = jnp.pad(params["fc_w"].T, ((0, 0), (0, F_pad - F)))   # (D, F_pad)
    fc_b = jnp.pad(params["fc_b"], ((0, 0), (0, F_pad - F)))      # (1, F_pad)

    def stk(name, transpose=False, bf16=False):
        arrs = [lp[name].T if transpose else lp[name] for lp in layers]
        out = jnp.stack(arrs, axis=0)
        return out.astype(jnp.bfloat16) if bf16 else out

    return dict(
        enc_wT=params["enc_w"].T.astype(jnp.bfloat16),   # (F, D) bf16
        enc_b=params["enc_b"],                           # (1, D)
        fc_wT=fc_wT.astype(jnp.bfloat16),                # (D, F_pad) bf16
        fc_b=fc_b,                                       # (1, F_pad)
        in_wT=stk("in_w", True, True),                   # (L, D, 3D) bf16
        in_b=stk("in_b"),                                # (L, 1, 3D)
        out_wT=stk("out_w", True, True),                 # (L, D, D)  bf16
        out_b=stk("out_b"),                              # (L, 1, D)
        ln1_w=stk("ln1_w"), ln1_b=stk("ln1_b"),          # (L, 1, D)
        l1_wT=stk("l1_w", True, True),                   # (L, D, H)  bf16
        l1_b=stk("l1_b"),                                # (L, 1, H)
        l2_wT=stk("l2_w", True, True),                   # (L, H, D)  bf16
        l2_b=stk("l2_b"),                                # (L, 1, D)
        ln2_w=stk("ln2_w"), ln2_b=stk("ln2_b"),          # (L, 1, D)
    )


def positional_encoding(seq_len, d_model):
    position = jnp.arange(seq_len, dtype=jnp.float32)[:, None]
    div_term = jnp.exp(jnp.arange(0, d_model, 2, dtype=jnp.float32)
                       * (-math.log(10000.0) / d_model))
    pe = jnp.zeros((seq_len, d_model), jnp.float32)
    pe = pe.at[:, 0::2].set(jnp.sin(position * div_term))
    pe = pe.at[:, 1::2].set(jnp.cos(position * div_term))
    return pe


# ----------------------------------------------------------------------------
# Forward pass (wrapper glue + pallas_call dispatch)
# ----------------------------------------------------------------------------
@partial(jax.jit, static_argnames=("nhead",))
def transformer_forward(src, prep, *, nhead):
    B, S, F = src.shape
    D = prep["enc_wT"].shape[1]
    H = prep["l1_wT"].shape[2]
    L = prep["in_wT"].shape[0]
    F_pad = prep["fc_wT"].shape[1]

    src = src.astype(jnp.float32)

    # make_len_mask: key-padding mask -> additive bias used inside attention.
    # TODO(synk): params.flags['pad'] is an external global in the reference;
    # the last two feature channels stand in as the pad-flag indices.
    pad_mask = jnp.sum(src[:, :, F - 2:F], axis=2) == 2.0          # (B, S) bool
    mask_bias = jnp.where(pad_mask, -1e30, 0.0).astype(jnp.float32)[:, None, :]

    pe = positional_encoding(S, D)                                  # (S, D)

    vmem_limit = _vmem_limit_bytes()
    Bb = _pick_batch_block(B, S)           # rows-per-block / megacore sharding
    nb = B // Bb

    # ---- fused encoder + all transformer layers in one call -----------------
    # grid = (batch blocks [parallel], layers [arbitrary]); the activation for
    # each batch block stays resident in its output VMEM block across layers,
    # stacked per-layer bf16 weights stream in double-buffered.
    # TODO(synk): for long S, additionally tile attention over key blocks with
    # an online softmax (flash pattern) to bound the SxS score tensor.
    x = pl.pallas_call(
        make_layer_kernel(Bb, S, F, D, H, nhead),
        out_shape=jax.ShapeDtypeStruct((B, S, D), jnp.float32),
        grid=(nb, L),
        in_specs=[
            pl.BlockSpec((Bb, S, F), lambda b, l: (b, 0, 0)),         # src
            pl.BlockSpec((S, D), lambda b, l: (0, 0)),                # pos enc
            pl.BlockSpec((F, D), lambda b, l: (0, 0)),                # enc_wT
            pl.BlockSpec((1, D), lambda b, l: (0, 0)),                # enc_b
            pl.BlockSpec((Bb, 1, S), lambda b, l: (b, 0, 0)),         # mask bias
            pl.BlockSpec((None, D, 3 * D), lambda b, l: (l, 0, 0)),   # in_wT
            pl.BlockSpec((None, 1, 3 * D), lambda b, l: (l, 0, 0)),   # in_b
            pl.BlockSpec((None, D, D), lambda b, l: (l, 0, 0)),       # out_wT
            pl.BlockSpec((None, 1, D), lambda b, l: (l, 0, 0)),       # out_b
            pl.BlockSpec((None, 1, D), lambda b, l: (l, 0, 0)),       # ln1_w
            pl.BlockSpec((None, 1, D), lambda b, l: (l, 0, 0)),       # ln1_b
            pl.BlockSpec((None, D, H), lambda b, l: (l, 0, 0)),       # l1_wT
            pl.BlockSpec((None, 1, H), lambda b, l: (l, 0, 0)),       # l1_b
            pl.BlockSpec((None, H, D), lambda b, l: (l, 0, 0)),       # l2_wT
            pl.BlockSpec((None, 1, D), lambda b, l: (l, 0, 0)),       # l2_b
            pl.BlockSpec((None, 1, D), lambda b, l: (l, 0, 0)),       # ln2_w
            pl.BlockSpec((None, 1, D), lambda b, l: (l, 0, 0)),       # ln2_b
        ],
        out_specs=pl.BlockSpec((Bb, S, D), lambda b, l: (b, 0, 0)),
        compiler_params=pltpu.CompilerParams(
            dimension_semantics=("parallel", "arbitrary"),
            vmem_limit_bytes=vmem_limit),
    )(src, pe, prep["enc_wT"], prep["enc_b"], mask_bias,
      prep["in_wT"], prep["in_b"], prep["out_wT"], prep["out_b"],
      prep["ln1_w"], prep["ln1_b"],
      prep["l1_wT"], prep["l1_b"], prep["l2_wT"], prep["l2_b"],
      prep["ln2_w"], prep["ln2_b"])

    # ---- output projection: flattened rows, lane-dense padded output --------
    rows = B * S
    Rt = _pick_row_tile(rows)
    y = pl.pallas_call(
        fc_out_kernel,
        out_shape=jax.ShapeDtypeStruct((rows, F_pad), jnp.float32),
        grid=(rows // Rt,),
        in_specs=[
            pl.BlockSpec((Rt, D), lambda r: (r, 0)),
            pl.BlockSpec((D, F_pad), lambda r: (0, 0)),    # resident weight
            pl.BlockSpec((1, F_pad), lambda r: (0, 0)),
        ],
        out_specs=pl.BlockSpec((Rt, F_pad), lambda r: (r, 0)),
        compiler_params=pltpu.CompilerParams(
            dimension_semantics=("parallel",),
            vmem_limit_bytes=vmem_limit),
    )(x.reshape(rows, D), prep["fc_wT"], prep["fc_b"])

    return y[:, :F].reshape(B, S, F)


# ----------------------------------------------------------------------------
if __name__ == "__main__":
    BATCH, SEQ, NUM_FEATS = 2, 8, 8
    D_MODEL, HIDDEN, NLAYERS, NHEAD = 32, 32, 3, 2

    key = jax.random.PRNGKey(0)
    k_src, k_par = jax.random.split(key)
    src = jax.random.normal(k_src, (BATCH, SEQ, NUM_FEATS), jnp.float32)

    params = init_params(k_par, NUM_FEATS, D_MODEL, HIDDEN, NLAYERS)
    prep = prepare_params(params)          # one-time transpose/stack/pad/bf16

    out = transformer_forward(src, prep, nhead=NHEAD)
    out = jax.block_until_ready(out)

    assert out.shape == (BATCH, SEQ, NUM_FEATS), out.shape
    assert bool(jnp.all(jnp.isfinite(out)))
    print("KERNEL_OK")
</pallas_src>

<mosaic_0001>
module attributes {stable_mosaic.version = 11 : i64} {
  func.func @fc_out_kernel(%arg0: i32, %arg1: memref<16x32xf32, #tpu.memory_space<vmem>>, %arg2: memref<32x128xbf16, #tpu.memory_space<vmem>>, %arg3: memref<1x128xf32, #tpu.memory_space<vmem>>, %arg4: memref<16x128xf32, #tpu.memory_space<vmem>>) attributes {dimension_semantics = [#tpu.dimension_semantics<parallel>], iteration_bounds = array<i64: 1>, scalar_prefetch = 0 : i64, scratch_operands = 0 : i64, tpu.core_type = #tpu.core_type<tc>, window_params = [{transform_indices = @transform_0, window_bounds = array<i64: 16, 32>}, {pipeline_mode = #tpu.pipeline_mode<synchronous>, transform_indices = @transform_1, window_bounds = array<i64: 32, 128>}, {pipeline_mode = #tpu.pipeline_mode<synchronous>, transform_indices = @transform_2, window_bounds = array<i64: 1, 128>}, {transform_indices = @transform_3, window_bounds = array<i64: 16, 128>}]} {
    %c0 = arith.constant 0 : index
    %c0_0 = arith.constant 0 : index
    %0 = vector.load %arg1[%c0, %c0_0] : memref<16x32xf32, #tpu.memory_space<vmem>>, vector<16x32xf32>
    %1 = arith.truncf %0 : vector<16x32xf32> to vector<16x32xbf16>
    %c0_1 = arith.constant 0 : index
    %c0_2 = arith.constant 0 : index
    %2 = vector.load %arg2[%c0_1, %c0_2] : memref<32x128xbf16, #tpu.memory_space<vmem>>, vector<32x128xbf16>
    %cst = arith.constant dense<0.000000e+00> : vector<16x128xf32>
    %3 = tpu.matmul %1, %2, %cst {dimension_numbers = #tpu.dot_dimension_numbers<[1], [0], [0], [1], [0, 0, 1, 1], [], []>} : vector<16x32xbf16>, vector<32x128xbf16>, vector<16x128xf32> -> vector<16x128xf32>
    %c0_3 = arith.constant 0 : index
    %c0_4 = arith.constant 0 : index
    %4 = vector.load %arg3[%c0_3, %c0_4] : memref<1x128xf32, #tpu.memory_space<vmem>>, vector<1x128xf32>
    %5 = vector.broadcast %4 : vector<1x128xf32> to vector<16x128xf32>
    %6 = arith.addf %3, %5 : vector<16x128xf32>
    %c0_5 = arith.constant 0 : index
    %c0_6 = arith.constant 0 : index
    %7 = vector.load %arg4[%c0_5, %c0_6] : memref<16x128xf32, #tpu.memory_space<vmem>>, vector<16x128xf32>
    tpu.vector_store %arg4[%c0_5, %c0_6], %6 {strides = array<i32>} : memref<16x128xf32, #tpu.memory_space<vmem>>, vector<16x128xf32>,
    return
  }
  func.func @transform_0(%arg0: i32) -> (i32, i32) {
    %c0_i32 = arith.constant 0 : i32
    %c0_i32_0 = arith.constant 0 : i32
    return %arg0, %c0_i32 : i32, i32
  }
  func.func @transform_1(%arg0: i32) -> (i32, i32) {
    %c0_i32 = arith.constant 0 : i32
    %c0_i32_0 = arith.constant 0 : i32
    %c0_i32_1 = arith.constant 0 : i32
    return %c0_i32, %c0_i32_0 : i32, i32
  }
  func.func @transform_2(%arg0: i32) -> (i32, i32) {
    %c0_i32 = arith.constant 0 : i32
    %c0_i32_0 = arith.constant 0 : i32
    %c0_i32_1 = arith.constant 0 : i32
    return %c0_i32, %c0_i32_0 : i32, i32
  }
  func.func @transform_3(%arg0: i32) -> (i32, i32) {
    %c0_i32 = arith.constant 0 : i32
    %c0_i32_0 = arith.constant 0 : i32
    return %arg0, %c0_i32 : i32, i32
  }
}

module attributes {stable_mosaic.version = 11 : i64} {
  func.func @layer_kernel(%arg0: i32, %arg1: i32, %arg2: memref<1x8x8xf32, #tpu.memory_space<vmem>>, %arg3: memref<8x32xf32, #tpu.memory_space<vmem>>, %arg4: memref<8x32xbf16, #tpu.memory_space<vmem>>, %arg5: memref<1x32xf32, #tpu.memory_space<vmem>>, %arg6: memref<1x1x8xf32, #tpu.memory_space<vmem>>, %arg7: memref<1x32x96xbf16, #tpu.memory_space<vmem>>, %arg8: memref<1x1x96xf32, #tpu.memory_space<vmem>>, %arg9: memref<1x32x32xbf16, #tpu.memory_space<vmem>>, %arg10: memref<1x1x32xf32, #tpu.memory_space<vmem>>, %arg11: memref<1x1x32xf32, #tpu.memory_space<vmem>>, %arg12: memref<1x1x32xf32, #tpu.memory_space<vmem>>, %arg13: memref<1x32x32xbf16, #tpu.memory_space<vmem>>, %arg14: memref<1x1x32xf32, #tpu.memory_space<vmem>>, %arg15: memref<1x32x32xbf16, #tpu.memory_space<vmem>>, %arg16: memref<1x1x32xf32, #tpu.memory_space<vmem>>, %arg17: memref<1x1x32xf32, #tpu.memory_space<vmem>>, %arg18: memref<1x1x32xf32, #tpu.memory_space<vmem>>, %arg19: memref<1x8x32xf32, #tpu.memory_space<vmem>>) attributes {dimension_semantics = [#tpu.dimension_semantics<parallel>, #tpu.dimension_semantics<arbitrary>], iteration_bounds = array<i64: 2, 3>, scalar_prefetch = 0 : i64, scratch_operands = 0 : i64, tpu.core_type = #tpu.core_type<tc>, window_params = [{transform_indices = @transform_0, window_bounds = array<i64: 1, 8, 8>}, {pipeline_mode = #tpu.pipeline_mode<synchronous>, transform_indices = @transform_1, window_bounds = array<i64: 8, 32>}, {pipeline_mode = #tpu.pipeline_mode<synchronous>, transform_indices = @transform_2, window_bounds = array<i64: 8, 32>}, {pipeline_mode = #tpu.pipeline_mode<synchronous>, transform_indices = @transform_3, window_bounds = array<i64: 1, 32>}, {transform_indices = @transform_4, window_bounds = array<i64: 1, 1, 8>}, {transform_indices = @transform_5, window_bounds = array<i64: 1, 32, 96>}, {transform_indices = @transform_6, window_bounds = array<i64: 1, 1, 96>}, {transform_indices = @transform_7, window_bounds = array<i64: 1, 32, 32>}, {transform_indices = @transform_8, window_bounds = array<i64: 1, 1, 32>}, {transform_indices = @transform_9, window_bounds = array<i64: 1, 1, 32>}, {transform_indices = @transform_10, window_bounds = array<i64: 1, 1, 32>}, {transform_indices = @transform_11, window_bounds = array<i64: 1, 32, 32>}, {transform_indices = @transform_12, window_bounds = array<i64: 1, 1, 32>}, {transform_indices = @transform_13, window_bounds = array<i64: 1, 32, 32>}, {transform_indices = @transform_14, window_bounds = array<i64: 1, 1, 32>}, {transform_indices = @transform_15, window_bounds = array<i64: 1, 1, 32>}, {transform_indices = @transform_16, window_bounds = array<i64: 1, 1, 32>}, {transform_indices = @transform_17, window_bounds = array<i64: 1, 8, 32>}]} {
    %c0_i32 = arith.constant 0 : i32
    %0 = arith.cmpi eq, %arg1, %c0_i32 : i32
    %1 = arith.extui %0 : i1 to i32
    %c0_i32_0 = arith.constant 0 : i32
    %2 = arith.cmpi ne, %1, %c0_i32_0 : i32
    scf.if %2 {
      %c0_69 = arith.constant 0 : index
      %c0_70 = arith.constant 0 : index
      %c0_71 = arith.constant 0 : index
      %145 = vector.load %arg2[%c0_69, %c0_70, %c0_71] : memref<1x8x8xf32, #tpu.memory_space<vmem>>, vector<1x8x8xf32>
      %146 = vector.shape_cast %145 : vector<1x8x8xf32> to vector<8x8xf32>
      %147 = arith.truncf %146 : vector<8x8xf32> to vector<8x8xbf16>
      %c0_72 = arith.constant 0 : index
      %c0_73 = arith.constant 0 : index
      %148 = vector.load %arg4[%c0_72, %c0_73] : memref<8x32xbf16, #tpu.memory_space<vmem>>, vector<8x32xbf16>
      %cst_74 = arith.constant dense<0.000000e+00> : vector<8x32xf32>
      %149 = tpu.matmul %147, %148, %cst_74 {dimension_numbers = #tpu.dot_dimension_numbers<[1], [0], [0], [1], [0, 0, 1, 1], [], []>} : vector<8x8xbf16>, vector<8x32xbf16>, vector<8x32xf32> -> vector<8x32xf32>
      %c0_75 = arith.constant 0 : index
      %c0_76 = arith.constant 0 : index
      %150 = vector.load %arg5[%c0_75, %c0_76] : memref<1x32xf32, #tpu.memory_space<vmem>>, vector<1x32xf32>
      %151 = vector.broadcast %150 : vector<1x32xf32> to vector<8x32xf32>
      %152 = arith.addf %149, %151 : vector<8x32xf32>
      %cst_77 = arith.constant 0.000000e+00 : f32
      %153 = vector.broadcast %cst_77 : f32 to vector<8x32xf32>
      %154 = arith.maximumf %152, %153 : vector<8x32xf32>
      %155 = vector.shape_cast %154 : vector<8x32xf32> to vector<1x8x32xf32>
      %c0_78 = arith.constant 0 : index
      %c0_79 = arith.constant 0 : index
      %156 = vector.load %arg3[%c0_78, %c0_79] : memref<8x32xf32, #tpu.memory_space<vmem>>, vector<8x32xf32>
      %157 = vector.shape_cast %156 : vector<8x32xf32> to vector<1x8x32xf32>
      %158 = arith.addf %155, %157 : vector<1x8x32xf32>
      %c0_80 = arith.constant 0 : index
      %c0_81 = arith.constant 0 : index
      %c0_82 = arith.constant 0 : index
      %159 = vector.load %arg19[%c0_80, %c0_81, %c0_82] : memref<1x8x32xf32, #tpu.memory_space<vmem>>, vector<1x8x32xf32>
      tpu.vector_store %arg19[%c0_80, %c0_81, %c0_82], %158 {strides = array<i32>} : memref<1x8x32xf32, #tpu.memory_space<vmem>>, vector<1x8x32xf32>,
    } else {
    }
    %c0 = arith.constant 0 : index
    %c0_1 = arith.constant 0 : index
    %c0_2 = arith.constant 0 : index
    %3 = vector.load %arg19[%c0, %c0_1, %c0_2] : memref<1x8x32xf32, #tpu.memory_space<vmem>>, vector<1x8x32xf32>
    %4 = vector.shape_cast %3 : vector<1x8x32xf32> to vector<8x32xf32>
    %5 = arith.truncf %4 : vector<8x32xf32> to vector<8x32xbf16>
    %c0_3 = arith.constant 0 : index
    %c0_4 = arith.constant 0 : index
    %c0_5 = arith.constant 0 : index
    %6 = vector.load %arg7[%c0_3, %c0_4, %c0_5] : memref<1x32x96xbf16, #tpu.memory_space<vmem>>, vector<1x32x96xbf16>
    %7 = vector.shape_cast %6 : vector<1x32x96xbf16> to vector<32x96xbf16>
    %cst = arith.constant dense<0.000000e+00> : vector<8x96xf32>
    %8 = tpu.matmul %5, %7, %cst {dimension_numbers = #tpu.dot_dimension_numbers<[1], [0], [0], [1], [0, 0, 1, 1], [], []>} : vector<8x32xbf16>, vector<32x96xbf16>, vector<8x96xf32> -> vector<8x96xf32>
    %c0_6 = arith.constant 0 : index
    %c0_7 = arith.constant 0 : index
    %c0_8 = arith.constant 0 : index
    %9 = vector.load %arg8[%c0_6, %c0_7, %c0_8] : memref<1x1x96xf32, #tpu.memory_space<vmem>>, vector<1x1x96xf32>
    %10 = vector.shape_cast %9 : vector<1x1x96xf32> to vector<1x96xf32>
    %11 = vector.broadcast %10 : vector<1x96xf32> to vector<8x96xf32>
    %12 = arith.addf %8, %11 : vector<8x96xf32>
    %13 = vector.shape_cast %12 : vector<8x96xf32> to vector<1x8x96xf32>
    %c0_9 = arith.constant 0 : index
    %c0_10 = arith.constant 0 : index
    %c0_11 = arith.constant 0 : index
    %14 = vector.load %arg6[%c0_9, %c0_10, %c0_11] : memref<1x1x8xf32, #tpu.memory_space<vmem>>, vector<1x1x8xf32>
    %15 = vector.shape_cast %14 : vector<1x1x8xf32> to vector<1x1x8xf32>
    %16 = vector.broadcast %15 : vector<1x1x8xf32> to vector<1x8x8xf32>
    %17 = vector.extract_strided_slice %13 {offsets = [0, 0, 0], sizes = [1, 8, 16], strides = [1, 1, 1]} : vector<1x8x96xf32> to vector<1x8x16xf32>
    %18 = vector.extract_strided_slice %13 {offsets = [0, 0, 32], sizes = [1, 8, 16], strides = [1, 1, 1]} : vector<1x8x96xf32> to vector<1x8x16xf32>
    %19 = vector.extract_strided_slice %13 {offsets = [0, 0, 64], sizes = [1, 8, 16], strides = [1, 1, 1]} : vector<1x8x96xf32> to vector<1x8x16xf32>
    %20 = arith.truncf %17 : vector<1x8x16xf32> to vector<1x8x16xbf16>
    %21 = arith.truncf %18 : vector<1x8x16xf32> to vector<1x8x16xbf16>
    "tpu.trace_start"() <{level = 10 : i32, message = "bqd,bkd->bqk"}> : () -> ()
    %cst_12 = arith.constant dense<0.000000e+00> : vector<1x8x8xf32>
    %22 = tpu.matmul %20, %21, %cst_12 {dimension_numbers = #tpu.dot_dimension_numbers<[2], [2], [1], [1], [0, 0, 0, 1, 1, 1], [0], [0]>} : vector<1x8x16xbf16>, vector<1x8x16xbf16>, vector<1x8x8xf32> -> vector<1x8x8xf32>
    "tpu.trace_stop"() : () -> ()
    %cst_13 = arith.constant 2.500000e-01 : f32
    %23 = vector.broadcast %cst_13 : f32 to vector<1x8x8xf32>
    %24 = arith.mulf %22, %23 : vector<1x8x8xf32>
    %25 = arith.addf %24, %16 : vector<1x8x8xf32>
    %cst_14 = arith.constant dense<0xFF800000> : vector<1x8xf32>
    %26 = vector.multi_reduction <maximumf>, %25, %cst_14 [2] : vector<1x8x8xf32> to vector<1x8xf32>
    %27 = vector.shape_cast %26 : vector<1x8xf32> to vector<1x8x1xf32>
    %28 = vector.broadcast %27 : vector<1x8x1xf32> to vector<1x8x8xf32>
    %29 = arith.subf %25, %28 : vector<1x8x8xf32>
    %30 = math.exp %29 : vector<1x8x8xf32>
    %cst_15 = arith.constant dense<0.000000e+00> : vector<1x8xf32>
    %31 = vector.multi_reduction <add>, %30, %cst_15 [2] : vector<1x8x8xf32> to vector<1x8xf32>
    %32 = vector.shape_cast %31 : vector<1x8xf32> to vector<1x8x1xf32>
    %33 = tpu.reciprocal %32 {approx = true} : vector<1x8x1xf32> -> vector<1x8x1xf32>
    %34 = vector.broadcast %33 : vector<1x8x1xf32> to vector<1x8x8xf32>
    %35 = arith.mulf %30, %34 : vector<1x8x8xf32>
    %36 = arith.truncf %35 : vector<1x8x8xf32> to vector<1x8x8xbf16>
    %37 = arith.truncf %19 : vector<1x8x16xf32> to vector<1x8x16xbf16>
    "tpu.trace_start"() <{level = 10 : i32, message = "bqk,bkd->bqd"}> : () -> ()
    %cst_16 = arith.constant dense<0.000000e+00> : vector<1x8x16xf32>
    %38 = tpu.matmul %36, %37, %cst_16 {dimension_numbers = #tpu.dot_dimension_numbers<[2], [1], [1], [2], [0, 0, 0, 1, 1, 2], [0], [0]>} : vector<1x8x8xbf16>, vector<1x8x16xbf16>, vector<1x8x16xf32> -> vector<1x8x16xf32>
    "tpu.trace_stop"() : () -> ()
    %39 = vector.extract_strided_slice %13 {offsets = [0, 0, 16], sizes = [1, 8, 16], strides = [1, 1, 1]} : vector<1x8x96xf32> to vector<1x8x16xf32>
    %40 = vector.extract_strided_slice %13 {offsets = [0, 0, 48], sizes = [1, 8, 16], strides = [1, 1, 1]} : vector<1x8x96xf32> to vector<1x8x16xf32>
    %41 = vector.extract_strided_slice %13 {offsets = [0, 0, 80], sizes = [1, 8, 16], strides = [1, 1, 1]} : vector<1x8x96xf32> to vector<1x8x16xf32>
    %42 = arith.truncf %39 : vector<1x8x16xf32> to vector<1x8x16xbf16>
    %43 = arith.truncf %40 : vector<1x8x16xf32> to vector<1x8x16xbf16>
    "tpu.trace_start"() <{level = 10 : i32, message = "bqd,bkd->bqk"}> : () -> ()
    %cst_17 = arith.constant dense<0.000000e+00> : vector<1x8x8xf32>
    %44 = tpu.matmul %42, %43, %cst_17 {dimension_numbers = #tpu.dot_dimension_numbers<[2], [2], [1], [1], [0, 0, 0, 1, 1, 1], [0], [0]>} : vector<1x8x16xbf16>, vector<1x8x16xbf16>, vector<1x8x8xf32> -> vector<1x8x8xf32>
    "tpu.trace_stop"() : () -> ()
    %cst_18 = arith.constant 2.500000e-01 : f32
    %45 = vector.broadcast %cst_18 : f32 to vector<1x8x8xf32>
    %46 = arith.mulf %44, %45 : vector<1x8x8xf32>
    %47 = arith.addf %46, %16 : vector<1x8x8xf32>
    %cst_19 = arith.constant dense<0xFF800000> : vector<1x8xf32>
    %48 = vector.multi_reduction <maximumf>, %47, %cst_19 [2] : vector<1x8x8xf32> to vector<1x8xf32>
    %49 = vector.shape_cast %48 : vector<1x8xf32> to vector<1x8x1xf32>
    %50 = vector.broadcast %49 : vector<1x8x1xf32> to vector<1x8x8xf32>
    %51 = arith.subf %47, %50 : vector<1x8x8xf32>
    %52 = math.exp %51 : vector<1x8x8xf32>
    %cst_20 = arith.constant dense<0.000000e+00> : vector<1x8xf32>
    %53 = vector.multi_reduction <add>, %52, %cst_20 [2] : vector<1x8x8xf32> to vector<1x8xf32>
    %54 = vector.shape_cast %53 : vector<1x8xf32> to vector<1x8x1xf32>
    %55 = tpu.reciprocal %54 {approx = true} : vector<1x8x1xf32> -> vector<1x8x1xf32>
    %56 = vector.broadcast %55 : vector<1x8x1xf32> to vector<1x8x8xf32>
    %57 = arith.mulf %52, %56 : vector<1x8x8xf32>
    %58 = arith.truncf %57 : vector<1x8x8xf32> to vector<1x8x8xbf16>
    %59 = arith.truncf %41 : vector<1x8x16xf32> to vector<1x8x16xbf16>
    "tpu.trace_start"() <{level = 10 : i32, message = "bqk,bkd->bqd"}> : () -> ()
    %cst_21 = arith.constant dense<0.000000e+00> : vector<1x8x16xf32>
    %60 = tpu.matmul %58, %59, %cst_21 {dimension_numbers = #tpu.dot_dimension_numbers<[2], [1], [1], [2], [0, 0, 0, 1, 1, 2], [0], [0]>} : vector<1x8x8xbf16>, vector<1x8x16xbf16>, vector<1x8x16xf32> -> vector<1x8x16xf32>
    "tpu.trace_stop"() : () -> ()
    %61 = tpu.concatenate %38, %60 in 2 : vector<1x8x16xf32>, vector<1x8x16xf32> -> vector<1x8x32xf32>
    %62 = vector.shape_cast %61 : vector<1x8x32xf32> to vector<8x32xf32>
    %63 = arith.truncf %62 : vector<8x32xf32> to vector<8x32xbf16>
    %c0_22 = arith.constant 0 : index
    %c0_23 = arith.constant 0 : index
    %c0_24 = arith.constant 0 : index
    %64 = vector.load %arg9[%c0_22, %c0_23, %c0_24] : memref<1x32x32xbf16, #tpu.memory_space<vmem>>, vector<1x32x32xbf16>
    %65 = vector.shape_cast %64 : vector<1x32x32xbf16> to vector<32x32xbf16>
    %cst_25 = arith.constant dense<0.000000e+00> : vector<8x32xf32>
    %66 = tpu.matmul %63, %65, %cst_25 {dimension_numbers = #tpu.dot_dimension_numbers<[1], [0], [0], [1], [0, 0, 1, 1], [], []>} : vector<8x32xbf16>, vector<32x32xbf16>, vector<8x32xf32> -> vector<8x32xf32>
    %c0_26 = arith.constant 0 : index
    %c0_27 = arith.constant 0 : index
    %c0_28 = arith.constant 0 : index
    %67 = vector.load %arg10[%c0_26, %c0_27, %c0_28] : memref<1x1x32xf32, #tpu.memory_space<vmem>>, vector<1x1x32xf32>
    %68 = vector.shape_cast %67 : vector<1x1x32xf32> to vector<1x32xf32>
    %69 = vector.broadcast %68 : vector<1x32xf32> to vector<8x32xf32>
    %70 = arith.addf %66, %69 : vector<8x32xf32>
    %71 = arith.addf %4, %70 : vector<8x32xf32>
    %cst_29 = arith.constant dense<0.000000e+00> : vector<8xf32>
    %72 = vector.multi_reduction <add>, %71, %cst_29 [1] : vector<8x32xf32> to vector<8xf32>
    %73 = vector.shape_cast %72 : vector<8xf32> to vector<8x1xf32>
    %cst_30 = arith.constant 3.200000e+01 : f32
    %74 = vector.broadcast %cst_30 : f32 to vector<8x1xf32>
    %75 = arith.divf %73, %74 : vector<8x1xf32>
    %76 = vector.broadcast %75 : vector<8x1xf32> to vector<8x32xf32>
    %77 = arith.subf %71, %76 : vector<8x32xf32>
    %78 = arith.mulf %77, %77 : vector<8x32xf32>
    %cst_31 = arith.constant dense<0.000000e+00> : vector<8xf32>
    %79 = vector.multi_reduction <add>, %78, %cst_31 [1] : vector<8x32xf32> to vector<8xf32>
    %80 = vector.shape_cast %79 : vector<8xf32> to vector<8x1xf32>
    %cst_32 = arith.constant 3.200000e+01 : f32
    %81 = vector.broadcast %cst_32 : f32 to vector<8x1xf32>
    %82 = arith.divf %80, %81 : vector<8x1xf32>
    %83 = vector.broadcast %75 : vector<8x1xf32> to vector<8x32xf32>
    %84 = arith.subf %71, %83 : vector<8x32xf32>
    %cst_33 = arith.constant 9.99999974E-6 : f32
    %85 = vector.broadcast %cst_33 : f32 to vector<8x1xf32>
    %86 = arith.addf %82, %85 : vector<8x1xf32>
    %87 = math.rsqrt %86 : vector<8x1xf32>
    %88 = vector.broadcast %87 : vector<8x1xf32> to vector<8x32xf32>
    %89 = arith.mulf %84, %88 : vector<8x32xf32>
    %c0_34 = arith.constant 0 : index
    %c0_35 = arith.constant 0 : index
    %c0_36 = arith.constant 0 : index
    %90 = vector.load %arg11[%c0_34, %c0_35, %c0_36] : memref<1x1x32xf32, #tpu.memory_space<vmem>>, vector<1x1x32xf32>
    %91 = vector.shape_cast %90 : vector<1x1x32xf32> to vector<1x32xf32>
    %92 = vector.broadcast %91 : vector<1x32xf32> to vector<8x32xf32>
    %93 = arith.mulf %89, %92 : vector<8x32xf32>
    %c0_37 = arith.constant 0 : index
    %c0_38 = arith.constant 0 : index
    %c0_39 = arith.constant 0 : index
    %94 = vector.load %arg12[%c0_37, %c0_38, %c0_39] : memref<1x1x32xf32, #tpu.memory_space<vmem>>, vector<1x1x32xf32>
    %95 = vector.shape_cast %94 : vector<1x1x32xf32> to vector<1x32xf32>
    %96 = vector.broadcast %95 : vector<1x32xf32> to vector<8x32xf32>
    %97 = arith.addf %93, %96 : vector<8x32xf32>
    %98 = arith.truncf %97 : vector<8x32xf32> to vector<8x32xbf16>
    %c0_40 = arith.constant 0 : index
    %c0_41 = arith.constant 0 : index
    %c0_42 = arith.constant 0 : index
    %99 = vector.load %arg13[%c0_40, %c0_41, %c0_42] : memref<1x32x32xbf16, #tpu.memory_space<vmem>>, vector<1x32x32xbf16>
    %100 = vector.shape_cast %99 : vector<1x32x32xbf16> to vector<32x32xbf16>
    %cst_43 = arith.constant dense<0.000000e+00> : vector<8x32xf32>
    %101 = tpu.matmul %98, %100, %cst_43 {dimension_numbers = #tpu.dot_dimension_numbers<[1], [0], [0], [1], [0, 0, 1, 1], [], []>} : vector<8x32xbf16>, vector<32x32xbf16>, vector<8x32xf32> -> vector<8x32xf32>
    %c0_44 = arith.constant 0 : index
    %c0_45 = arith.constant 0 : index
    %c0_46 = arith.constant 0 : index
    %102 = vector.load %arg14[%c0_44, %c0_45, %c0_46] : memref<1x1x32xf32, #tpu.memory_space<vmem>>, vector<1x1x32xf32>
    %103 = vector.shape_cast %102 : vector<1x1x32xf32> to vector<1x32xf32>
    %104 = vector.broadcast %103 : vector<1x32xf32> to vector<8x32xf32>
    %105 = arith.addf %101, %104 : vector<8x32xf32>
    %cst_47 = arith.constant 0.000000e+00 : f32
    %106 = vector.broadcast %cst_47 : f32 to vector<8x32xf32>
    %107 = arith.maximumf %105, %106 : vector<8x32xf32>
    %108 = arith.truncf %107 : vector<8x32xf32> to vector<8x32xbf16>
    %c0_48 = arith.constant 0 : index
    %c0_49 = arith.constant 0 : index
    %c0_50 = arith.constant 0 : index
    %109 = vector.load %arg15[%c0_48, %c0_49, %c0_50] : memref<1x32x32xbf16, #tpu.memory_space<vmem>>, vector<1x32x32xbf16>
    %110 = vector.shape_cast %109 : vector<1x32x32xbf16> to vector<32x32xbf16>
    %cst_51 = arith.constant dense<0.000000e+00> : vector<8x32xf32>
    %111 = tpu.matmul %108, %110, %cst_51 {dimension_numbers = #tpu.dot_dimension_numbers<[1], [0], [0], [1], [0, 0, 1, 1], [], []>} : vector<8x32xbf16>, vector<32x32xbf16>, vector<8x32xf32> -> vector<8x32xf32>
    %c0_52 = arith.constant 0 : index
    %c0_53 = arith.constant 0 : index
    %c0_54 = arith.constant 0 : index
    %112 = vector.load %arg16[%c0_52, %c0_53, %c0_54] : memref<1x1x32xf32, #tpu.memory_space<vmem>>, vector<1x1x32xf32>
    %113 = vector.shape_cast %112 : vector<1x1x32xf32> to vector<1x32xf32>
    %114 = vector.broadcast %113 : vector<1x32xf32> to vector<8x32xf32>
    %115 = arith.addf %111, %114 : vector<8x32xf32>
    %116 = arith.addf %97, %115 : vector<8x32xf32>
    %cst_55 = arith.constant dense<0.000000e+00> : vector<8xf32>
    %117 = vector.multi_reduction <add>, %116, %cst_55 [1] : vector<8x32xf32> to vector<8xf32>
    %118 = vector.shape_cast %117 : vector<8xf32> to vector<8x1xf32>
    %cst_56 = arith.constant 3.200000e+01 : f32
    %119 = vector.broadcast %cst_56 : f32 to vector<8x1xf32>
    %120 = arith.divf %118, %119 : vector<8x1xf32>
    %121 = vector.broadcast %120 : vector<8x1xf32> to vector<8x32xf32>
    %122 = arith.subf %116, %121 : vector<8x32xf32>
    %123 = arith.mulf %122, %122 : vector<8x32xf32>
    %cst_57 = arith.constant dense<0.000000e+00> : vector<8xf32>
    %124 = vector.multi_reduction <add>, %123, %cst_57 [1] : vector<8x32xf32> to vector<8xf32>
    %125 = vector.shape_cast %124 : vector<8xf32> to vector<8x1xf32>
    %cst_58 = arith.constant 3.200000e+01 : f32
    %126 = vector.broadcast %cst_58 : f32 to vector<8x1xf32>
    %127 = arith.divf %125, %126 : vector<8x1xf32>
    %128 = vector.broadcast %120 : vector<8x1xf32> to vector<8x32xf32>
    %129 = arith.subf %116, %128 : vector<8x32xf32>
    %cst_59 = arith.constant 9.99999974E-6 : f32
    %130 = vector.broadcast %cst_59 : f32 to vector<8x1xf32>
    %131 = arith.addf %127, %130 : vector<8x1xf32>
    %132 = math.rsqrt %131 : vector<8x1xf32>
    %133 = vector.broadcast %132 : vector<8x1xf32> to vector<8x32xf32>
    %134 = arith.mulf %129, %133 : vector<8x32xf32>
    %c0_60 = arith.constant 0 : index
    %c0_61 = arith.constant 0 : index
    %c0_62 = arith.constant 0 : index
    %135 = vector.load %arg17[%c0_60, %c0_61, %c0_62] : memref<1x1x32xf32, #tpu.memory_space<vmem>>, vector<1x1x32xf32>
    %136 = vector.shape_cast %135 : vector<1x1x32xf32> to vector<1x32xf32>
    %137 = vector.broadcast %136 : vector<1x32xf32> to vector<8x32xf32>
    %138 = arith.mulf %134, %137 : vector<8x32xf32>
    %c0_63 = arith.constant 0 : index
    %c0_64 = arith.constant 0 : index
    %c0_65 = arith.constant 0 : index
    %139 = vector.load %arg18[%c0_63, %c0_64, %c0_65] : memref<1x1x32xf32, #tpu.memory_space<vmem>>, vector<1x1x32xf32>
    %140 = vector.shape_cast %139 : vector<1x1x32xf32> to vector<1x32xf32>
    %141 = vector.broadcast %140 : vector<1x32xf32> to vector<8x32xf32>
    %142 = arith.addf %138, %141 : vector<8x32xf32>
    %143 = vector.shape_cast %142 : vector<8x32xf32> to vector<1x8x32xf32>
    %c0_66 = arith.constant 0 : index
    %c0_67 = arith.constant 0 : index
    %c0_68 = arith.constant 0 : index
    %144 = vector.load %arg19[%c0_66, %c0_67, %c0_68] : memref<1x8x32xf32, #tpu.memory_space<vmem>>, vector<1x8x32xf32>
    tpu.vector_store %arg19[%c0_66, %c0_67, %c0_68], %143 {strides = array<i32>} : memref<1x8x32xf32, #tpu.memory_space<vmem>>, vector<1x8x32xf32>,
    return
  }
  func.func @transform_0(%arg0: i32, %arg1: i32) -> (i32, i32, i32) {
    %c0_i32 = arith.constant 0 : i32
    %c0_i32_0 = arith.constant 0 : i32
    %c0_i32_1 = arith.constant 0 : i32
    return %arg0, %c0_i32, %c0_i32_0 : i32, i32, i32
  }
  func.func @transform_1(%arg0: i32, %arg1: i32) -> (i32, i32) {
    %c0_i32 = arith.constant 0 : i32
    %c0_i32_0 = arith.constant 0 : i32
    %c0_i32_1 = arith.constant 0 : i32
    return %c0_i32, %c0_i32_0 : i32, i32
  }
  func.func @transform_2(%arg0: i32, %arg1: i32) -> (i32, i32) {
    %c0_i32 = arith.constant 0 : i32
    %c0_i32_0 = arith.constant 0 : i32
    %c0_i32_1 = arith.constant 0 : i32
    return %c0_i32, %c0_i32_0 : i32, i32
  }
  func.func @transform_3(%arg0: i32, %arg1: i32) -> (i32, i32) {
    %c0_i32 = arith.constant 0 : i32
    %c0_i32_0 = arith.constant 0 : i32
    %c0_i32_1 = arith.constant 0 : i32
    return %c0_i32, %c0_i32_0 : i32, i32
  }
  func.func @transform_4(%arg0: i32, %arg1: i32) -> (i32, i32, i32) {
    %c0_i32 = arith.constant 0 : i32
    %c0_i32_0 = arith.constant 0 : i32
    %c0_i32_1 = arith.constant 0 : i32
    return %arg0, %c0_i32, %c0_i32_0 : i32, i32, i32
  }
  func.func @transform_5(%arg0: i32, %arg1: i32) -> (i32, i32, i32) {
    %c0_i32 = arith.constant 0 : i32
    %c0_i32_0 = arith.constant 0 : i32
    %c0_i32_1 = arith.constant 0 : i32
    return %arg1, %c0_i32, %c0_i32_0 : i32, i32, i32
  }
  func.func @transform_6(%arg0: i32, %arg1: i32) -> (i32, i32, i32) {
    %c0_i32 = arith.constant 0 : i32
    %c0_i32_0 = arith.constant 0 : i32
    %c0_i32_1 = arith.constant 0 : i32
    return %arg1, %c0_i32, %c0_i32_0 : i32, i32, i32
  }
  func.func @transform_7(%arg0: i32, %arg1: i32) -> (i32, i32, i32) {
    %c0_i32 = arith.constant 0 : i32
    %c0_i32_0 = arith.constant 0 : i32
    %c0_i32_1 = arith.constant 0 : i32
    return %arg1, %c0_i32, %c0_i32_0 : i32, i32, i32
  }
  func.func @transform_8(%arg0: i32, %arg1: i32) -> (i32, i32, i32) {
    %c0_i32 = arith.constant 0 : i32
    %c0_i32_0 = arith.constant 0 : i32
    %c0_i32_1 = arith.constant 0 : i32
    return %arg1, %c0_i32, %c0_i32_0 : i32, i32, i32
  }
  func.func @transform_9(%arg0: i32, %arg1: i32) -> (i32, i32, i32) {
    %c0_i32 = arith.constant 0 : i32
    %c0_i32_0 = arith.constant 0 : i32
    %c0_i32_1 = arith.constant 0 : i32
    return %arg1, %c0_i32, %c0_i32_0 : i32, i32, i32
  }
  func.func @transform_10(%arg0: i32, %arg1: i32) -> (i32, i32, i32) {
    %c0_i32 = arith.constant 0 : i32
    %c0_i32_0 = arith.constant 0 : i32
    %c0_i32_1 = arith.constant 0 : i32
    return %arg1, %c0_i32, %c0_i32_0 : i32, i32, i32
  }
  func.func @transform_11(%arg0: i32, %arg1: i32) -> (i32, i32, i32) {
    %c0_i32 = arith.constant 0 : i32
    %c0_i32_0 = arith.constant 0 : i32
    %c0_i32_1 = arith.constant 0 : i32
    return %arg1, %c0_i32, %c0_i32_0 : i32, i32, i32
  }
  func.func @transform_12(%arg0: i32, %arg1: i32) -> (i32, i32, i32) {
    %c0_i32 = arith.constant 0 : i32
    %c0_i32_0 = arith.constant 0 : i32
    %c0_i32_1 = arith.constant 0 : i32
    return %arg1, %c0_i32, %c0_i32_0 : i32, i32, i32
  }
  func.func @transform_13(%arg0: i32, %arg1: i32) -> (i32, i32, i32) {
    %c0_i32 = arith.constant 0 : i32
    %c0_i32_0 = arith.constant 0 : i32
    %c0_i32_1 = arith.constant 0 : i32
    return %arg1, %c0_i32, %c0_i32_0 : i32, i32, i32
  }
  func.func @transform_14(%arg0: i32, %arg1: i32) -> (i32, i32, i32) {
    %c0_i32 = arith.constant 0 : i32
    %c0_i32_0 = arith.constant 0 : i32
    %c0_i32_1 = arith.constant 0 : i32
    return %arg1, %c0_i32, %c0_i32_0 : i32, i32, i32
  }
  func.func @transform_15(%arg0: i32, %arg1: i32) -> (i32, i32, i32) {
    %c0_i32 = arith.constant 0 : i32
    %c0_i32_0 = arith.constant 0 : i32
    %c0_i32_1 = arith.constant 0 : i32
    return %arg1, %c0_i32, %c0_i32_0 : i32, i32, i32
  }
  func.func @transform_16(%arg0: i32, %arg1: i32) -> (i32, i32, i32) {
    %c0_i32 = arith.constant 0 : i32
    %c0_i32_0 = arith.constant 0 : i32
    %c0_i32_1 = arith.constant 0 : i32
    return %arg1, %c0_i32, %c0_i32_0 : i32, i32, i32
  }
  func.func @transform_17(%arg0: i32, %arg1: i32) -> (i32, i32, i32) {
    %c0_i32 = arith.constant 0 : i32
    %c0_i32_0 = arith.constant 0 : i32
    %c0_i32_1 = arith.constant 0 : i32
    return %arg0, %c0_i32, %c0_i32_0 : i32, i32, i32
  }
}

</mosaic_0001>

<llo_original>
// kernel: transformer_forward.3
$region0: #{transformer_forward.3}
  #allocation0 [shape = 'u32[]', space=smem, size = 0x4, offset = 0x4, fixed_abs, tag = 'smem constant byte address 0x4 - core index']
  #allocation1 [shape = 'u32[72,128]{1,0:T(1,128)}', space=vmem, size = 0x9000, scoped, tag = 'internal scratch']
  %s0 = inlined_call_operand.vmem [shape: f32[16,32], index: 0, kind: input, shape index: {}]
  %s1 = inlined_call_operand.vmem [shape: bf16[32,128], index: 1, kind: input, shape index: {}]
  %s2 = inlined_call_operand.vmem [shape: f32[1,128], index: 2, kind: input, shape index: {}]
  %s3 = inlined_call_operand.vmem [shape: f32[16,128], index: 3, kind: output, shape index: {}]
  %s4 = sld [smem:[#allocation0]]
  $region22: #{transformer_forward.3} parent=0
    _
  %s6 = ssub.s32 1, %s4
  %s7 = scalar_select 0, %s6, %s4
  // Predicated region
  $region2: #{transformer_forward.3} parent=0 // pred_check
    _
  $region3: #{transformer_forward.3} parent=0 // pred_check_branch
    %9 = sbr.rel (0) target = $region5
  $region4: #{transformer_forward.3} parent=0 // pred_region
    _
  $region5: #{transformer_forward.3} parent=0 // pred_fallthru
    _
  // Predicated region
  $region6: #{transformer_forward.3} parent=0 // pred_check
    _
  $region7: #{transformer_forward.3} parent=0 // pred_check_branch
    %11 = sbr.rel (0) target = $region9
  $region8: #{transformer_forward.3} parent=0 // pred_region
    _
  $region9: #{transformer_forward.3} parent=0 // pred_fallthru
    _
  // Predicated region
  $region10: #{transformer_forward.3} parent=0 // pred_check
    _
  $region11: #{transformer_forward.3} parent=0 // pred_check_branch
    %13 = sbr.rel (0) target = $region13
  $region12: #{transformer_forward.3} parent=0 // pred_region
    _
  $region13: #{transformer_forward.3} parent=0 // pred_fallthru
    _
  %v15 = vld [vmem:[%s0] sm:$0xff]
  %v16 = vld [vmem:[%s0 + $0x8] sm:$0xff]
  %v17 = vpack.c.bf16 %v16, %v15
  %v18 = vld [vmem:[%s1] sm:$0xf]
  %v19 = vld [vmem:[%s1 + $0x4] sm:$0xf]
  %v20 = vld [vmem:[%s1 + $0x8] sm:$0xf]
  %v21 = vld [vmem:[%s1 + $0xc] sm:$0xf]
  %v22 = vld [vmem:[%s2] sm:$0x1]
  %v24 = vperm.slane %v22, 0
  %v30 = vunpack.c.l.b16 %v18
  %v31 = vunpack.c.l.b16 %v19
  %v32 = vunpack.c.l.b16 %v20
  %v33 = vunpack.c.l.b16 %v21
  %v34 = vpack.c.b16 %v31, %v30
  %v35 = vpack.c.b16 %v33, %v32
  %vm38 = vcmask 261120
  %v40 = vsel %vm38, %v17, 0
  %42 = vmatpush.bf16.msra.mxu0 0
  %43 = vmatpush.bf16.msra.mxu0 0
  %44 = vmatpush.bf16.msra.mxu0 0
  %45 = vmatpush.bf16.msra.mxu0 0
  %46 = vmatpush.bf16.msra.mxu0 0
  %47 = vmatpush.bf16.msra.mxu0 0
  %48 = vmatpush.bf16.msra.mxu0 %v35
  %49 = vmatpush.bf16.msra.mxu0 %v34
  %50 = vmatmul.bf16.gmra.mxu0 %v40
  %v51 = vpop.f32.mrf.mxu0
  %v52 = vadd.f32 %v24, %v51
  %v53 = vpop.f32.mrf.mxu0
  %v54 = vadd.f32 %v24, %v53
  %55 = vdwg.mxu0
  %56 = vst [vmem:[%s3] sm:$0xff] %v52
  %57 = vst [vmem:[%s3 + $0x8] sm:$0xff] %v54
  // Predicated region
  $region14: #{transformer_forward.3} parent=0 // pred_check
    _
  $region15: #{transformer_forward.3} parent=0 // pred_check_branch
    %59 = sbr.rel (0) target = $region17
  $region16: #{transformer_forward.3} parent=0 // pred_region
    _
  $region17: #{transformer_forward.3} parent=0 // pred_fallthru
    _
  // Predicated region
  $region18: #{transformer_forward.3} parent=0 // pred_check
    _
  $region19: #{transformer_forward.3} parent=0 // pred_check_branch
    %61 = sbr.rel (0) target = $region21
  $region20: #{transformer_forward.3} parent=0 // pred_region
    _
  $region21: #{transformer_forward.3} parent=0 // pred_fallthru
    _

// kernel: transformer_forward.2
$region0: #{transformer_forward.2}
  #allocation0 [shape = 'u32[]', space=smem, size = 0x4, offset = 0x4, fixed_abs, tag = 'smem constant byte address 0x4 - core index']
  #allocation1 [shape = 'u32[72,128]{1,0:T(1,128)}', space=vmem, size = 0x9000, scoped, tag = 'internal scratch']
  %s0 = inlined_call_operand.vmem [shape: f32[2,8,8], index: 0, kind: input, shape index: {}]
  %s1 = inlined_call_operand.vmem [shape: f32[8,32], index: 1, kind: input, shape index: {}]
  %s2 = inlined_call_operand.vmem [shape: bf16[8,32], index: 2, kind: input, shape index: {}]
  %s3 = inlined_call_operand.vmem [shape: f32[1,32], index: 3, kind: input, shape index: {}]
  %s4 = inlined_call_operand.vmem [shape: f32[2,1,8], index: 4, kind: input, shape index: {}]
  %s5 = inlined_call_operand.vmem [shape: bf16[3,32,96], index: 5, kind: input, shape index: {}]
  %s6 = inlined_call_operand.vmem [shape: f32[3,1,96], index: 6, kind: input, shape index: {}]
  %s7 = inlined_call_operand.hbm [shape: bf16[3,32,32], index: 7, kind: input, shape index: {}]
  %s8 = inlined_call_operand.hbm [shape: f32[3,1,32], index: 8, kind: input, shape index: {}]
  %s9 = inlined_call_operand.vmem [shape: f32[3,1,32], index: 9, kind: input, shape index: {}]
  %s10 = inlined_call_operand.hbm [shape: f32[3,1,32], index: 10, kind: input, shape index: {}]
  %s11 = inlined_call_operand.vmem [shape: bf16[3,32,32], index: 11, kind: input, shape index: {}]
  %s12 = inlined_call_operand.vmem [shape: f32[3,1,32], index: 12, kind: input, shape index: {}]
  %s13 = inlined_call_operand.hbm [shape: bf16[3,32,32], index: 13, kind: input, shape index: {}]
  %s14 = inlined_call_operand.hbm [shape: f32[3,1,32], index: 14, kind: input, shape index: {}]
  %s15 = inlined_call_operand.hbm [shape: f32[3,1,32], index: 15, kind: input, shape index: {}]
  %s16 = inlined_call_operand.hbm [shape: f32[3,1,32], index: 16, kind: input, shape index: {}]
  %s17 = inlined_call_operand.vmem [shape: f32[2,8,32], index: 17, kind: output, shape index: {}]
  %s18 = sld [smem:[#allocation0]]
  $region133: #{transformer_forward.2} parent=0
    _
  %s20 = ssub.s32 1, %s18
  %s21 = scalar_select 0, %s20, %s18
  $region1: #{transformer_forward.2} parent=0
    #allocation2 [shape = 'u8[16384]{0}', space=vmem, size = 0x4000, scoped, tag = 'input window, operand 7']
    #allocation3 [shape = 's32[2]{0}', space=sflag, size = 0x8, scoped, tag = 'scoped memory for transformer_forward.2']
    #allocation4 [shape = 'u8[1024]{0}', space=vmem, size = 0x400, scoped, tag = 'input window, operand 8']
    #allocation5 [shape = 's32[2]{0}', space=sflag, size = 0x8, scoped, tag = 'scoped memory for transformer_forward.2']
    #allocation6 [shape = 'u8[1024]{0}', space=vmem, size = 0x400, scoped, tag = 'input window, operand 10']
    #allocation7 [shape = 'u8[16384]{0}', space=vmem, size = 0x4000, scoped, tag = 'input window, operand 13']
    #allocation8 [shape = 's32[2]{0}', space=sflag, size = 0x8, scoped, tag = 'scoped memory for transformer_forward.2']
    #allocation9 [shape = 'u8[1024]{0}', space=vmem, size = 0x400, scoped, tag = 'input window, operand 14']
    #allocation10 [shape = 'u8[1024]{0}', space=vmem, size = 0x400, scoped, tag = 'input window, operand 15']
    #allocation11 [shape = 's32[2]{0}', space=sflag, size = 0x8, scoped, tag = 'scoped memory for transformer_forward.2']
    #allocation12 [shape = 'u8[1024]{0}', space=vmem, size = 0x400, scoped, tag = 'input window, operand 16']
    %22 = vsyncpa [#allocation3], 0
    %s23 = scalar_lea.sflag [#allocation3], 1
    %24 = vsyncpa %s23, 0
    %25 = vsyncpa [#allocation5], 0
    %s26 = scalar_lea.sflag [#allocation5], 1
    %27 = vsyncpa %s26, 0
    %28 = vsyncpa [#allocation8], 0
    %s29 = scalar_lea.sflag [#allocation8], 1
    %30 = vsyncpa %s29, 0
    %31 = vsyncpa [#allocation11], 0
    %s32 = scalar_lea.sflag [#allocation11], 1
    %33 = vsyncpa %s32, 0
    loop: start=0, step=1, limit=8
    $region2: #{transformer_forward.2} parent=1 // loop_pre_header
      _
    $region3: #{transformer_forward.2} parent=1 // loop_header
      %s35 = sphi 0, %s39
      %p36 = scmp.ge.s32.totalorder %s35, 8
      %s42 = sphi 0, %s54
      %s43 = sphi 0, %s50
      %s44 = sphi 0, %s42
      %s45 = sphi 0, %s43
      %s46 = sphi 0, %s44
      %s47 = sphi 0, %s45
      %s57 = sphi 0, %s59
      %s60 = sphi 0, %s57
      %s61 = sphi 0, %s60
      %s77 = sphi 0, %s61
      %s81 = sphi 0, %s81
      %s83 = sphi 0, %s81
      %s84 = sphi 0, %s83
      %s98 = sphi 0, %s84
      %s102 = sphi 0, %s102
      %s104 = sphi 0, %s102
      %s105 = sphi 0, %s104
      %s119 = sphi 0, %s105
      %s123 = sphi 0, %s123
      %s125 = sphi 0, %s123
      %s126 = sphi 0, %s125
      %s140 = sphi 0, %s126
      %s146 = sphi 0, %s148
      %s149 = sphi 0, %s146
      %s150 = sphi 0, %s149
      %s166 = sphi 0, %s150
      %s172 = sphi 0, %s174
      %s175 = sphi 0, %s172
      %s176 = sphi 0, %s175
      %s192 = sphi 0, %s176
      %s198 = sphi 0, %s200
      %s201 = sphi 0, %s198
      %s202 = sphi 0, %s201
      %s218 = sphi 0, %s202
      %s224 = sphi 0, %s226
      %s227 = sphi 0, %s224
      %s228 = sphi 0, %s227
      %s244 = sphi 0, %s228
      %s250 = sphi 0, %s252
      %s253 = sphi 0, %s250
      %s254 = sphi 0, %s253
      %s270 = sphi 0, %s254
      %s276 = sphi 0, %s278
      %s279 = sphi 0, %s276
      %s280 = sphi 0, %s279
      %s296 = sphi 0, %s280
      %s302 = sphi 0, %s304
      %s305 = sphi 0, %s302
      %s306 = sphi 0, %s305
      %s322 = sphi 0, %s306
      %s328 = sphi 0, %s330
      %s331 = sphi 0, %s328
      %s332 = sphi 0, %s331
      %s348 = sphi 0, %s332
      %s354 = sphi 0, %s356
      %s357 = sphi 0, %s354
      %s358 = sphi 0, %s357
      %s374 = sphi 0, %s358
      %s380 = sphi 0, %s382
      %s383 = sphi 0, %s380
      %s384 = sphi 0, %s383
      %s400 = sphi 0, %s384
      %s406 = sphi 0, %s408
      %s409 = sphi 0, %s406
      %s410 = sphi 0, %s409
      %s426 = sphi 0, %s410
      %s432 = sphi 0, %s434
      %s435 = sphi 0, %s432
      %s436 = sphi 0, %s435
      %s452 = sphi 0, %s436
      %s458 = sphi 0, %s460
      %s461 = sphi 0, %s458
      %s462 = sphi 0, %s461
      %s478 = sphi 0, %s462
      %s484 = sphi 0, %s486
      %s487 = sphi 0, %s484
      %s488 = sphi 0, %s487
      %s504 = sphi 0, %s488
    $region4: #{transformer_forward.2} parent=1 // loop_header_branch
      %38 = sbr.rel (%p36) target = $region8
    $region5: #{transformer_forward.2} parent=1 // loop_body
      %s40 = ssub.s32 %s35, 1
      %s41 = ssub.s32 %s35, 2
      %s48 = sadd.s32 1, %s43
      %p49 = scmp.ge.s32.totalorder %s48, 3
      %s50 = scalar_select %p49, 0, %s48
      %s51 = sadd.s32 1, %s42
      %s52 = scalar_select %p49, %s51, %s42
      %p53 = scmp.ge.s32.totalorder %s52, 2
      %s54 = scalar_select %p53, 0, %s52
      %s55 = ssub.s32 %s42, %s54
      %p56 = scmp.eq.s32.totalorder %s55, 0
      %s58 = sadd.s32 %s57, 1
      %s59 = scalar_select %p56, %s57, %s58
      %p62 = pneg %p56
      %p63 = scmp.eq.s32.totalorder %s35, 5
      %p64 = por %p62, %p63
      %p65 = scmp.ne.s32.totalorder %s57, %s60
      %p66 = scmp.eq.s32.totalorder %s35, 0
      %p67 = por %p65, %p66
      %p68 = scmp.ne.s32.totalorder %s57, %s60
      %p69 = scmp.eq.s32.totalorder %s40, 5
      %p70 = por %p68, %p69
      %p71 = scmp.ne.s32.totalorder %s60, %s61
      %p72 = scmp.eq.s32.totalorder %s40, 0
      %p73 = por %p71, %p72
      %p74 = scmp.ne.s32.totalorder %s60, %s61
      %p75 = scmp.eq.s32.totalorder %s41, 5
      %p76 = por %p74, %p75
      %p78 = scmp.ne.s32.totalorder %s61, %s77
      %p79 = scmp.eq.s32.totalorder %s41, 0
      %p80 = por %p78, %p79
      %s82 = sadd.s32 %s81, 1
      %p85 = scmp.eq.s32.totalorder %s35, 5
      %p86 = scmp.ne.s32.totalorder %s81, %s83
      %p87 = scmp.eq.s32.totalorder %s35, 0
      %p88 = por %p86, %p87
      %p89 = scmp.ne.s32.totalorder %s81, %s83
      %p90 = scmp.eq.s32.totalorder %s40, 5
      %p91 = por %p89, %p90
      %p92 = scmp.ne.s32.totalorder %s83, %s84
      %p93 = scmp.eq.s32.totalorder %s40, 0
      %p94 = por %p92, %p93
      %p95 = scmp.ne.s32.totalorder %s83, %s84
      %p96 = scmp.eq.s32.totalorder %s41, 5
      %p97 = por %p95, %p96
      %p99 = scmp.ne.s32.totalorder %s84, %s98
      %p100 = scmp.eq.s32.totalorder %s41, 0
      %p101 = por %p99, %p100
      %s103 = sadd.s32 %s102, 1
      %p106 = scmp.eq.s32.totalorder %s35, 5
      %p107 = scmp.ne.s32.totalorder %s102, %s104
      %p108 = scmp.eq.s32.totalorder %s35, 0
      %p109 = por %p107, %p108
      %p110 = scmp.ne.s32.totalorder %s102, %s104
      %p111 = scmp.eq.s32.totalorder %s40, 5
      %p112 = por %p110, %p111
      %p113 = scmp.ne.s32.totalorder %s104, %s105
      %p114 = scmp.eq.s32.totalorder %s40, 0
      %p115 = por %p113, %p114
      %p116 = scmp.ne.s32.totalorder %s104, %s105
      %p117 = scmp.eq.s32.totalorder %s41, 5
      %p118 = por %p116, %p117
      %p120 = scmp.ne.s32.totalorder %s105, %s119
      %p121 = scmp.eq.s32.totalorder %s41, 0
      %p122 = por %p120, %p121
      %s124 = sadd.s32 %s123, 1
      %p127 = scmp.eq.s32.totalorder %s35, 5
      %p128 = scmp.ne.s32.totalorder %s123, %s125
      %p129 = scmp.eq.s32.totalorder %s35, 0
      %p130 = por %p128, %p129
      %p131 = scmp.ne.s32.totalorder %s123, %s125
      %p132 = scmp.eq.s32.totalorder %s40, 5
      %p133 = por %p131, %p132
      %p134 = scmp.ne.s32.totalorder %s125, %s126
      %p135 = scmp.eq.s32.totalorder %s40, 0
      %p136 = por %p134, %p135
      %p137 = scmp.ne.s32.totalorder %s125, %s126
      %p138 = scmp.eq.s32.totalorder %s41, 5
      %p139 = por %p137, %p138
      %p141 = scmp.ne.s32.totalorder %s126, %s140
      %p142 = scmp.eq.s32.totalorder %s41, 0
      %p143 = por %p141, %p142
      %s144 = ssub.s32 %s42, %s54
      %p145 = scmp.eq.s32.totalorder %s144, 0
      %s147 = sadd.s32 %s146, 1
      %s148 = scalar_select %p145, %s146, %s147
      %p151 = pneg %p145
      %p152 = scmp.eq.s32.totalorder %s35, 5
      %p153 = por %p151, %p152
      %p154 = scmp.ne.s32.totalorder %s146, %s149
      %p155 = scmp.eq.s32.totalorder %s35, 0
      %p156 = por %p154, %p155
      %p157 = scmp.ne.s32.totalorder %s146, %s149
      %p158 = scmp.eq.s32.totalorder %s40, 5
      %p159 = por %p157, %p158
      %p160 = scmp.ne.s32.totalorder %s149, %s150
      %p161 = scmp.eq.s32.totalorder %s40, 0
      %p162 = por %p160, %p161
      %p163 = scmp.ne.s32.totalorder %s149, %s150
      %p164 = scmp.eq.s32.totalorder %s41, 5
      %p165 = por %p163, %p164
      %p167 = scmp.ne.s32.totalorder %s150, %s166
      %p168 = scmp.eq.s32.totalorder %s41, 0
      %p169 = por %p167, %p168
      %s170 = ssub.s32 %s43, %s50
      %p171 = scmp.eq.s32.totalorder %s170, 0
      %s173 = sadd.s32 %s172, 1
      %s174 = scalar_select %p171, %s172, %s173
      %p177 = pneg %p171
      %p178 = scmp.eq.s32.totalorder %s35, 5
      %p179 = por %p177, %p178
      %p180 = scmp.ne.s32.totalorder %s172, %s175
      %p181 = scmp.eq.s32.totalorder %s35, 0
      %p182 = por %p180, %p181
      %p183 = scmp.ne.s32.totalorder %s172, %s175
      %p184 = scmp.eq.s32.totalorder %s40, 5
      %p185 = por %p183, %p184
      %p186 = scmp.ne.s32.totalorder %s175, %s176
      %p187 = scmp.eq.s32.totalorder %s40, 0
      %p188 = por %p186, %p187
      %p189 = scmp.ne.s32.totalorder %s175, %s176
      %p190 = scmp.eq.s32.totalorder %s41, 5
      %p191 = por %p189, %p190
      %p193 = scmp.ne.s32.totalorder %s176, %s192
      %p194 = scmp.eq.s32.totalorder %s41, 0
      %p195 = por %p193, %p194
      %s196 = ssub.s32 %s43, %s50
      %p197 = scmp.eq.s32.totalorder %s196, 0
      %s199 = sadd.s32 %s198, 1
      %s200 = scalar_select %p197, %s198, %s199
      %p203 = pneg %p197
      %p204 = scmp.eq.s32.totalorder %s35, 5
      %p205 = por %p203, %p204
      %p206 = scmp.ne.s32.totalorder %s198, %s201
      %p207 = scmp.eq.s32.totalorder %s35, 0
      %p208 = por %p206, %p207
      %p209 = scmp.ne.s32.totalorder %s198, %s201
      %p210 = scmp.eq.s32.totalorder %s40, 5
      %p211 = por %p209, %p210
      %p212 = scmp.ne.s32.totalorder %s201, %s202
      %p213 = scmp.eq.s32.totalorder %s40, 0
      %p214 = por %p212, %p213
      %p215 = scmp.ne.s32.totalorder %s201, %s202
      %p216 = scmp.eq.s32.totalorder %s41, 5
      %p217 = por %p215, %p216
      %p219 = scmp.ne.s32.totalorder %s202, %s218
      %p220 = scmp.eq.s32.totalorder %s41, 0
      %p221 = por %p219, %p220
      %s222 = ssub.s32 %s43, %s50
      %p223 = scmp.eq.s32.totalorder %s222, 0
      %s225 = sadd.s32 %s224, 1
      %s226 = scalar_select %p223, %s224, %s225
      %p229 = pneg %p223
      %p230 = scmp.eq.s32.totalorder %s35, 5
      %p231 = por %p229, %p230
      %p232 = scmp.ne.s32.totalorder %s224, %s227
      %p233 = scmp.eq.s32.totalorder %s35, 0
      %p234 = por %p232, %p233
      %p235 = scmp.ne.s32.totalorder %s224, %s227
      %p236 = scmp.eq.s32.totalorder %s40, 5
      %p237 = por %p235, %p236
      %p238 = scmp.ne.s32.totalorder %s227, %s228
      %p239 = scmp.eq.s32.totalorder %s40, 0
      %p240 = por %p238, %p239
      %p241 = scmp.ne.s32.totalorder %s227, %s228
      %p242 = scmp.eq.s32.totalorder %s41, 5
      %p243 = por %p241, %p242
      %p245 = scmp.ne.s32.totalorder %s228, %s244
      %p246 = scmp.eq.s32.totalorder %s41, 0
      %p247 = por %p245, %p246
      %s248 = ssub.s32 %s43, %s50
      %p249 = scmp.eq.s32.totalorder %s248, 0
      %s251 = sadd.s32 %s250, 1
      %s252 = scalar_select %p249, %s250, %s251
      %p255 = pneg %p249
      %p256 = scmp.eq.s32.totalorder %s35, 5
      %p257 = por %p255, %p256
      %p258 = scmp.ne.s32.totalorder %s250, %s253
      %p259 = scmp.eq.s32.totalorder %s35, 0
      %p260 = por %p258, %p259
      %p261 = scmp.ne.s32.totalorder %s250, %s253
      %p262 = scmp.eq.s32.totalorder %s40, 5
      %p263 = por %p261, %p262
      %p264 = scmp.ne.s32.totalorder %s253, %s254
      %p265 = scmp.eq.s32.totalorder %s40, 0
      %p266 = por %p264, %p265
      %p267 = scmp.ne.s32.totalorder %s253, %s254
      %p268 = scmp.eq.s32.totalorder %s41, 5
      %p269 = por %p267, %p268
      %p271 = scmp.ne.s32.totalorder %s254, %s270
      %p272 = scmp.eq.s32.totalorder %s41, 0
      %p273 = por %p271, %p272
      %s274 = ssub.s32 %s43, %s50
      %p275 = scmp.eq.s32.totalorder %s274, 0
      %s277 = sadd.s32 %s276, 1
      %s278 = scalar_select %p275, %s276, %s277
      %p281 = pneg %p275
      %p282 = scmp.eq.s32.totalorder %s35, 5
      %p283 = por %p281, %p282
      %p284 = scmp.ne.s32.totalorder %s276, %s279
      %p285 = scmp.eq.s32.totalorder %s35, 0
      %p286 = por %p284, %p285
      %p287 = scmp.ne.s32.totalorder %s276, %s279
      %p288 = scmp.eq.s32.totalorder %s40, 5
      %p289 = por %p287, %p288
      %p290 = scmp.ne.s32.totalorder %s279, %s280
      %p291 = scmp.eq.s32.totalorder %s40, 0
      %p292 = por %p290, %p291
      %p293 = scmp.ne.s32.totalorder %s279, %s280
      %p294 = scmp.eq.s32.totalorder %s41, 5
      %p295 = por %p293, %p294
      %p297 = scmp.ne.s32.totalorder %s280, %s296
      %p298 = scmp.eq.s32.totalorder %s41, 0
      %p299 = por %p297, %p298
      %s300 = ssub.s32 %s43, %s50
      %p301 = scmp.eq.s32.totalorder %s300, 0
      %s303 = sadd.s32 %s302, 1
      %s304 = scalar_select %p301, %s302, %s303
      %p307 = pneg %p301
      %p308 = scmp.eq.s32.totalorder %s35, 5
      %p309 = por %p307, %p308
      %p310 = scmp.ne.s32.totalorder %s302, %s305
      %p311 = scmp.eq.s32.totalorder %s35, 0
      %p312 = por %p310, %p311
      %p313 = scmp.ne.s32.totalorder %s302, %s305
      %p314 = scmp.eq.s32.totalorder %s40, 5
      %p315 = por %p313, %p314
      %p316 = scmp.ne.s32.totalorder %s305, %s306
      %p317 = scmp.eq.s32.totalorder %s40, 0
      %p318 = por %p316, %p317
      %p319 = scmp.ne.s32.totalorder %s305, %s306
      %p320 = scmp.eq.s32.totalorder %s41, 5
      %p321 = por %p319, %p320
      %p323 = scmp.ne.s32.totalorder %s306, %s322
      %p324 = scmp.eq.s32.totalorder %s41, 0
      %p325 = por %p323, %p324
      %s326 = ssub.s32 %s43, %s50
      %p327 = scmp.eq.s32.totalorder %s326, 0
      %s329 = sadd.s32 %s328, 1
      %s330 = scalar_select %p327, %s328, %s329
      %p333 = pneg %p327
      %p334 = scmp.eq.s32.totalorder %s35, 5
      %p335 = por %p333, %p334
      %p336 = scmp.ne.s32.totalorder %s328, %s331
      %p337 = scmp.eq.s32.totalorder %s35, 0
      %p338 = por %p336, %p337
      %p339 = scmp.ne.s32.totalorder %s328, %s331
      %p340 = scmp.eq.s32.totalorder %s40, 5
      %p341 = por %p339, %p340
      %p342 = scmp.ne.s32.totalorder %s331, %s332
      %p343 = scmp.eq.s32.totalorder %s40, 0
      %p344 = por %p342, %p343
      %p345 = scmp.ne.s32.totalorder %s331, %s332
      %p346 = scmp.eq.s32.totalorder %s41, 5
      %p347 = por %p345, %p346
      %p349 = scmp.ne.s32.totalorder %s332, %s348
      %p350 = scmp.eq.s32.totalorder %s41, 0
      %p351 = por %p349, %p350
      %s352 = ssub.s32 %s43, %s50
      %p353 = scmp.eq.s32.totalorder %s352, 0
      %s355 = sadd.s32 %s354, 1
      %s356 = scalar_select %p353, %s354, %s355
      %p359 = pneg %p353
      %p360 = scmp.eq.s32.totalorder %s35, 5
      %p361 = por %p359, %p360
      %p362 = scmp.ne.s32.totalorder %s354, %s357
      %p363 = scmp.eq.s32.totalorder %s35, 0
      %p364 = por %p362, %p363
      %p365 = scmp.ne.s32.totalorder %s354, %s357
      %p366 = scmp.eq.s32.totalorder %s40, 5
      %p367 = por %p365, %p366
      %p368 = scmp.ne.s32.totalorder %s357, %s358
      %p369 = scmp.eq.s32.totalorder %s40, 0
      %p370 = por %p368, %p369
      %p371 = scmp.ne.s32.totalorder %s357, %s358
      %p372 = scmp.eq.s32.totalorder %s41, 5
      %p373 = por %p371, %p372
      %p375 = scmp.ne.s32.totalorder %s358, %s374
      %p376 = scmp.eq.s32.totalorder %s41, 0
      %p377 = por %p375, %p376
      %s378 = ssub.s32 %s43, %s50
      %p379 = scmp.eq.s32.totalorder %s378, 0
      %s381 = sadd.s32 %s380, 1
      %s382 = scalar_select %p379, %s380, %s381
      %p385 = pneg %p379
      %p386 = scmp.eq.s32.totalorder %s35, 5
      %p387 = por %p385, %p386
      %p388 = scmp.ne.s32.totalorder %s380, %s383
      %p389 = scmp.eq.s32.totalorder %s35, 0
      %p390 = por %p388, %p389
      %p391 = scmp.ne.s32.totalorder %s380, %s383
      %p392 = scmp.eq.s32.totalorder %s40, 5
      %p393 = por %p391, %p392
      %p394 = scmp.ne.s32.totalorder %s383, %s384
      %p395 = scmp.eq.s32.totalorder %s40, 0
      %p396 = por %p394, %p395
      %p397 = scmp.ne.s32.totalorder %s383, %s384
      %p398 = scmp.eq.s32.totalorder %s41, 5
      %p399 = por %p397, %p398
      %p401 = scmp.ne.s32.totalorder %s384, %s400
      %p402 = scmp.eq.s32.totalorder %s41, 0
      %p403 = por %p401, %p402
      %s404 = ssub.s32 %s43, %s50
      %p405 = scmp.eq.s32.totalorder %s404, 0
      %s407 = sadd.s32 %s406, 1
      %s408 = scalar_select %p405, %s406, %s407
      %p411 = pneg %p405
      %p412 = scmp.eq.s32.totalorder %s35, 5
      %p413 = por %p411, %p412
      %p414 = scmp.ne.s32.totalorder %s406, %s409
      %p415 = scmp.eq.s32.totalorder %s35, 0
      %p416 = por %p414, %p415
      %p417 = scmp.ne.s32.totalorder %s406, %s409
      %p418 = scmp.eq.s32.totalorder %s40, 5
      %p419 = por %p417, %p418
      %p420 = scmp.ne.s32.totalorder %s409, %s410
      %p421 = scmp.eq.s32.totalorder %s40, 0
      %p422 = por %p420, %p421
      %p423 = scmp.ne.s32.totalorder %s409, %s410
      %p424 = scmp.eq.s32.totalorder %s41, 5
      %p425 = por %p423, %p424
      %p427 = scmp.ne.s32.totalorder %s410, %s426
      %p428 = scmp.eq.s32.totalorder %s41, 0
      %p429 = por %p427, %p428
      %s430 = ssub.s32 %s43, %s50
      %p431 = scmp.eq.s32.totalorder %s430, 0
      %s433 = sadd.s32 %s432, 1
      %s434 = scalar_select %p431, %s432, %s433
      %p437 = pneg %p431
      %p438 = scmp.eq.s32.totalorder %s35, 5
      %p439 = por %p437, %p438
      %p440 = scmp.ne.s32.totalorder %s432, %s435
      %p441 = scmp.eq.s32.totalorder %s35, 0
      %p442 = por %p440, %p441
      %p443 = scmp.ne.s32.totalorder %s432, %s435
      %p444 = scmp.eq.s32.totalorder %s40, 5
      %p445 = por %p443, %p444
      %p446 = scmp.ne.s32.totalorder %s435, %s436
      %p447 = scmp.eq.s32.totalorder %s40, 0
      %p448 = por %p446, %p447
      %p449 = scmp.ne.s32.totalorder %s435, %s436
      %p450 = scmp.eq.s32.totalorder %s41, 5
      %p451 = por %p449, %p450
      %p453 = scmp.ne.s32.totalorder %s436, %s452
      %p454 = scmp.eq.s32.totalorder %s41, 0
      %p455 = por %p453, %p454
      %s456 = ssub.s32 %s43, %s50
      %p457 = scmp.eq.s32.totalorder %s456, 0
      %s459 = sadd.s32 %s458, 1
      %s460 = scalar_select %p457, %s458, %s459
      %p463 = pneg %p457
      %p464 = scmp.eq.s32.totalorder %s35, 5
      %p465 = por %p463, %p464
      %p466 = scmp.ne.s32.totalorder %s458, %s461
      %p467 = scmp.eq.s32.totalorder %s35, 0
      %p468 = por %p466, %p467
      %p469 = scmp.ne.s32.totalorder %s458, %s461
      %p470 = scmp.eq.s32.totalorder %s40, 5
      %p471 = por %p469, %p470
      %p472 = scmp.ne.s32.totalorder %s461, %s462
      %p473 = scmp.eq.s32.totalorder %s40, 0
      %p474 = por %p472, %p473
      %p475 = scmp.ne.s32.totalorder %s461, %s462
      %p476 = scmp.eq.s32.totalorder %s41, 5
      %p477 = por %p475, %p476
      %p479 = scmp.ne.s32.totalorder %s462, %s478
      %p480 = scmp.eq.s32.totalorder %s41, 0
      %p481 = por %p479, %p480
      %s482 = ssub.s32 %s42, %s54
      %p483 = scmp.eq.s32.totalorder %s482, 0
      %s485 = sadd.s32 %s484, 1
      %s486 = scalar_select %p483, %s484, %s485
      %p489 = pneg %p483
      %p490 = scmp.eq.s32.totalorder %s35, 5
      %p491 = por %p489, %p490
      %p492 = scmp.ne.s32.totalorder %s484, %s487
      %p493 = scmp.eq.s32.totalorder %s35, 0
      %p494 = por %p492, %p493
      %p495 = scmp.ne.s32.totalorder %s484, %s487
      %p496 = scmp.eq.s32.totalorder %s40, 5
      %p497 = por %p495, %p496
      %p498 = scmp.ne.s32.totalorder %s487, %s488
      %p499 = scmp.eq.s32.totalorder %s40, 0
      %p500 = por %p498, %p499
      %p501 = scmp.ne.s32.totalorder %s487, %s488
      %p502 = scmp.eq.s32.totalorder %s41, 5
      %p503 = por %p501, %p502
      %p505 = scmp.ne.s32.totalorder %s488, %s504
      %p506 = scmp.eq.s32.totalorder %s41, 0
      %p507 = por %p505, %p506
      %p508 = scmp.le.s32.totalorder 1, %s35
      %p509 = scmp.lt.s32.totalorder %s35, 7
      %p510 = pnand %p508, %p509
      %p511 = pneg %p510
      // Predicated region
      $region9: #{transformer_forward.2} parent=5 // pred_check
        _
      $region10: #{transformer_forward.2} parent=5 // pred_check_branch
        %513 = sbr.rel (%p510) target = $region12
      $region11: #{transformer_forward.2} parent=5 // pred_region
        %s514 = ssub.s32 %s35, 1
        // Predicated region
        $region13: #{transformer_forward.2} parent=11 // pred_check
          %p515 = pneg %p94
        $region14: #{transformer_forward.2} parent=11 // pred_check_branch
          %517 = sbr.rel (%p515) target = $region16
        $region15: #{transformer_forward.2} parent=11 // pred_region
          _
        $region16: #{transformer_forward.2} parent=11 // pred_fallthru
          _
        // Predicated region
        $region17: #{transformer_forward.2} parent=11 // pred_check
          %p518 = pneg %p115
        $region18: #{transformer_forward.2} parent=11 // pred_check_branch
          %520 = sbr.rel (%p518) target = $region20
        $region19: #{transformer_forward.2} parent=11 // pred_region
          _
        $region20: #{transformer_forward.2} parent=11 // pred_fallthru
          _
        // Predicated region
        $region21: #{transformer_forward.2} parent=11 // pred_check
          %p521 = pneg %p136
        $region22: #{transformer_forward.2} parent=11 // pred_check_branch
          %523 = sbr.rel (%p521) target = $region24
        $region23: #{transformer_forward.2} parent=11 // pred_region
          _
        $region24: #{transformer_forward.2} parent=11 // pred_fallthru
          _
      $region12: #{transformer_forward.2} parent=5 // pred_fallthru
        _
      %p524 = scmp.lt.s32.totalorder %s35, 6
      // Predicated region
      $region25: #{transformer_forward.2} parent=5 // pred_check
        %p525 = pneg %p524
      $region26: #{transformer_forward.2} parent=5 // pred_check_branch
        %527 = sbr.rel (%p525) target = $region28
      $region27: #{transformer_forward.2} parent=5 // pred_region
        // Predicated region
        $region29: #{transformer_forward.2} parent=27 // pred_check
          %p528 = pneg %p67
        $region30: #{transformer_forward.2} parent=27 // pred_check_branch
          %530 = sbr.rel (%p528) target = $region32
        $region31: #{transformer_forward.2} parent=27 // pred_region
          %p531 = scmp.lt.s32.totalorder %s42, 1
          %s532 = scalar_select %p531, %s42, 1
          %s533 = smul.addr %s532, 8
          %s534 = scalar_lea.vmem %s0, %s533
        $region32: #{transformer_forward.2} parent=27 // pred_fallthru
          _
        // Predicated region
        $region33: #{transformer_forward.2} parent=27 // pred_check
          %p535 = pneg %p156
        $region34: #{transformer_forward.2} parent=27 // pred_check_branch
          %537 = sbr.rel (%p535) target = $region36
        $region35: #{transformer_forward.2} parent=27 // pred_region
          %p538 = scmp.lt.s32.totalorder %s42, 1
          %s539 = scalar_select %p538, %s42, 1
          %s540 = scalar_lea.vmem %s4, %s539
        $region36: #{transformer_forward.2} parent=27 // pred_fallthru
          _
        // Predicated region
        $region37: #{transformer_forward.2} parent=27 // pred_check
          %p541 = pneg %p182
        $region38: #{transformer_forward.2} parent=27 // pred_check_branch
          %543 = sbr.rel (%p541) target = $region40
        $region39: #{transformer_forward.2} parent=27 // pred_region
          %p544 = scmp.lt.s32.totalorder %s43, 2
          %s545 = scalar_select %p544, %s43, 2
          %s546 = smul.addr %s545, 4
          %s547 = smul.addr %s546, 4
          %s548 = scalar_lea.vmem %s5, %s547
        $region40: #{transformer_forward.2} parent=27 // pred_fallthru
          _
        // Predicated region
        $region41: #{transformer_forward.2} parent=27 // pred_check
          %p549 = pneg %p208
        $region42: #{transformer_forward.2} parent=27 // pred_check_branch
          %551 = sbr.rel (%p549) target = $region44
        $region43: #{transformer_forward.2} parent=27 // pred_region
          %p552 = scmp.lt.s32.totalorder %s43, 2
          %s553 = scalar_select %p552, %s43, 2
          %s554 = scalar_lea.vmem %s6, %s553
        $region44: #{transformer_forward.2} parent=27 // pred_fallthru
          _
        // Predicated region
        $region45: #{transformer_forward.2} parent=27 // pred_check
          %p555 = pneg %p234
        $region46: #{transformer_forward.2} parent=27 // pred_check_branch
          %557 = sbr.rel (%p555) target = $region48
        $region47: #{transformer_forward.2} parent=27 // pred_region
          %s558 = sand.u32 %s224, 1
          %s559 = scalar_lea.sflag [#allocation3], %s558
          %s560 = sand.u32 %s224, 1
          %s561 = smul.addr %s560, 16
          %s562 = scalar_lea.vmem [#allocation2], %s561
          %564 = vsyncadd %s559, 0
          %s565 = smul.addr %s43, 4
          %s566 = smul.addr %s565, 4
          %s567 = scalar_lea.hbm %s7, %s566
          %s568 = sshll.u32 %s567, 4
          %s569 = int_to_ptr.hbm [resolvable:$true] %s568
          %s570 = sshll.u32 %s562, 4
          %s571 = int_to_ptr.vmem [resolvable:$true] %s570
          %576 = dma.hbm_to_vmem [thread:$0]  %s569, 256, %s571, %s559, 64, 64, 4
        $region48: #{transformer_forward.2} parent=27 // pred_fallthru
          _
        // Predicated region
        $region49: #{transformer_forward.2} parent=27 // pred_check
          %p577 = pneg %p260
        $region50: #{transformer_forward.2} parent=27 // pred_check_branch
          %579 = sbr.rel (%p577) target = $region52
        $region51: #{transformer_forward.2} parent=27 // pred_region
          %s580 = sand.u32 %s35, 1
          %s581 = scalar_lea.sflag [#allocation5], %s580
          %s582 = sand.u32 %s250, 1
          %s583 = scalar_lea.vmem [#allocation4], %s582
          %585 = vsyncadd %s581, 0
          %s586 = scalar_lea.hbm %s8, %s43
          %s588 = sshll.u32 %s586, 4
          %s589 = int_to_ptr.hbm [resolvable:$true] %s588
          %s590 = sshll.u32 %s583, 4
          %s591 = int_to_ptr.vmem [resolvable:$true] %s590
          %593 = dma.hbm_to_vmem [thread:$0]  %s589, 16, %s591, %s581
        $region52: #{transformer_forward.2} parent=27 // pred_fallthru
          _
        // Predicated region
        $region53: #{transformer_forward.2} parent=27 // pred_check
          %p594 = pneg %p286
        $region54: #{transformer_forward.2} parent=27 // pred_check_branch
          %596 = sbr.rel (%p594) target = $region56
        $region55: #{transformer_forward.2} parent=27 // pred_region
          %p597 = scmp.lt.s32.totalorder %s43, 2
          %s598 = scalar_select %p597, %s43, 2
          %s599 = scalar_lea.vmem %s9, %s598
        $region56: #{transformer_forward.2} parent=27 // pred_fallthru
          _
        // Predicated region
        $region57: #{transformer_forward.2} parent=27 // pred_check
          %p600 = pneg %p312
        $region58: #{transformer_forward.2} parent=27 // pred_check_branch
          %602 = sbr.rel (%p600) target = $region60
        $region59: #{transformer_forward.2} parent=27 // pred_region
          %s603 = sand.u32 %s35, 1
          %s604 = scalar_lea.sflag [#allocation5], %s603
          %s605 = sand.u32 %s302, 1
          %s606 = scalar_lea.vmem [#allocation6], %s605
          %608 = vsyncadd %s604, 0
          %s609 = scalar_lea.hbm %s10, %s43
          %s611 = sshll.u32 %s609, 4
          %s612 = int_to_ptr.hbm [resolvable:$true] %s611
          %s613 = sshll.u32 %s606, 4
          %s614 = int_to_ptr.vmem [resolvable:$true] %s613
          %616 = dma.hbm_to_vmem [thread:$0]  %s612, 16, %s614, %s604
        $region60: #{transformer_forward.2} parent=27 // pred_fallthru
          _
        // Predicated region
        $region61: #{transformer_forward.2} parent=27 // pred_check
          %p617 = pneg %p338
        $region62: #{transformer_forward.2} parent=27 // pred_check_branch
          %619 = sbr.rel (%p617) target = $region64
        $region63: #{transformer_forward.2} parent=27 // pred_region
          %p620 = scmp.lt.s32.totalorder %s43, 2
          %s621 = scalar_select %p620, %s43, 2
          %s622 = smul.addr %s621, 4
          %s623 = smul.addr %s622, 4
          %s624 = scalar_lea.vmem %s11, %s623
        $region64: #{transformer_forward.2} parent=27 // pred_fallthru
          _
        // Predicated region
        $region65: #{transformer_forward.2} parent=27 // pred_check
          %p625 = pneg %p364
        $region66: #{transformer_forward.2} parent=27 // pred_check_branch
          %627 = sbr.rel (%p625) target = $region68
        $region67: #{transformer_forward.2} parent=27 // pred_region
          %p628 = scmp.lt.s32.totalorder %s43, 2
          %s629 = scalar_select %p628, %s43, 2
          %s630 = scalar_lea.vmem %s12, %s629
        $region68: #{transformer_forward.2} parent=27 // pred_fallthru
          _
        // Predicated region
        $region69: #{transformer_forward.2} parent=27 // pred_check
          %p631 = pneg %p390
        $region70: #{transformer_forward.2} parent=27 // pred_check_branch
          %633 = sbr.rel (%p631) target = $region72
        $region71: #{transformer_forward.2} parent=27 // pred_region
          %s634 = sand.u32 %s35, 1
          %s635 = scalar_lea.sflag [#allocation8], %s634
          %s636 = sand.u32 %s380, 1
          %s637 = smul.addr %s636, 16
          %s638 = scalar_lea.vmem [#allocation7], %s637
          %640 = vsyncadd %s635, 0
          %s641 = smul.addr %s43, 4
          %s642 = smul.addr %s641, 4
          %s643 = scalar_lea.hbm %s13, %s642
          %s644 = sshll.u32 %s643, 4
          %s645 = int_to_ptr.hbm [resolvable:$true] %s644
          %s646 = sshll.u32 %s638, 4
          %s647 = int_to_ptr.vmem [resolvable:$true] %s646
          %652 = dma.hbm_to_vmem [thread:$0]  %s645, 256, %s647, %s635, 64, 64, 4
        $region72: #{transformer_forward.2} parent=27 // pred_fallthru
          _
        // Predicated region
        $region73: #{transformer_forward.2} parent=27 // pred_check
          %p653 = pneg %p416
        $region74: #{transformer_forward.2} parent=27 // pred_check_branch
          %655 = sbr.rel (%p653) target = $region76
        $region75: #{transformer_forward.2} parent=27 // pred_region
          %s656 = sand.u32 %s35, 1
          %s657 = scalar_lea.sflag [#allocation8], %s656
          %s658 = sand.u32 %s406, 1
          %s659 = scalar_lea.vmem [#allocation9], %s658
          %661 = vsyncadd %s657, 0
          %s662 = scalar_lea.hbm %s14, %s43
          %s664 = sshll.u32 %s662, 4
          %s665 = int_to_ptr.hbm [resolvable:$true] %s664
          %s666 = sshll.u32 %s659, 4
          %s667 = int_to_ptr.vmem [resolvable:$true] %s666
          %669 = dma.hbm_to_vmem [thread:$0]  %s665, 16, %s667, %s657
        $region76: #{transformer_forward.2} parent=27 // pred_fallthru
          _
        // Predicated region
        $region77: #{transformer_forward.2} parent=27 // pred_check
          %p670 = pneg %p442
        $region78: #{transformer_forward.2} parent=27 // pred_check_branch
          %672 = sbr.rel (%p670) target = $region80
        $region79: #{transformer_forward.2} parent=27 // pred_region
          %s673 = sand.u32 %s35, 1
          %s674 = scalar_lea.sflag [#allocation11], %s673
          %s675 = sand.u32 %s432, 1
          %s676 = scalar_lea.vmem [#allocation10], %s675
          %678 = vsyncadd %s674, 0
          %s679 = scalar_lea.hbm %s15, %s43
          %s681 = sshll.u32 %s679, 4
          %s682 = int_to_ptr.hbm [resolvable:$true] %s681
          %s683 = sshll.u32 %s676, 4
          %s684 = int_to_ptr.vmem [resolvable:$true] %s683
          %686 = dma.hbm_to_vmem [thread:$0]  %s682, 16, %s684, %s674
        $region80: #{transformer_forward.2} parent=27 // pred_fallthru
          _
        // Predicated region
        $region81: #{transformer_forward.2} parent=27 // pred_check
          %p687 = pneg %p468
        $region82: #{transformer_forward.2} parent=27 // pred_check_branch
          %689 = sbr.rel (%p687) target = $region84
        $region83: #{transformer_forward.2} parent=27 // pred_region
          %s690 = sand.u32 %s35, 1
          %s691 = scalar_lea.sflag [#allocation11], %s690
          %s692 = sand.u32 %s458, 1
          %s693 = scalar_lea.vmem [#allocation12], %s692
          %695 = vsyncadd %s691, 0
          %s696 = scalar_lea.hbm %s16, %s43
          %s698 = sshll.u32 %s696, 4
          %s699 = int_to_ptr.hbm [resolvable:$true] %s698
          %s700 = sshll.u32 %s693, 4
          %s701 = int_to_ptr.vmem [resolvable:$true] %s700
          %703 = dma.hbm_to_vmem [thread:$0]  %s699, 16, %s701, %s691
        $region84: #{transformer_forward.2} parent=27 // pred_fallthru
          _
      $region28: #{transformer_forward.2} parent=5 // pred_fallthru
        _
      %p704 = scmp.le.s32.totalorder 1, %s35
      %p705 = scmp.lt.s32.totalorder %s35, 7
      %p706 = pnand %p704, %p705
      %p707 = pneg %p706
      // Predicated region
      $region85: #{transformer_forward.2} parent=5 // pred_check
        _
      $region86: #{transformer_forward.2} parent=5 // pred_check_branch
        %709 = sbr.rel (%p706) target = $region88
      $region87: #{transformer_forward.2} parent=5 // pred_region
        %s710 = ssub.s32 %s35, 1
        %s711 = sand.u32 %s227, 1
        %s712 = scalar_lea.sflag [#allocation3], %s711
        %s713 = sand.u32 %s227, 1
        %s714 = smul.addr %s713, 16
        %s715 = scalar_lea.vmem [#allocation2], %s714
        // Predicated region
        $region89: #{transformer_forward.2} parent=87 // pred_check
          %p716 = pneg %p240
        $region90: #{transformer_forward.2} parent=87 // pred_check_branch
          %718 = sbr.rel (%p716) target = $region92
        $region91: #{transformer_forward.2} parent=87 // pred_region
          %720 = dma.done %s712, 256
        $region92: #{transformer_forward.2} parent=87 // pred_fallthru
          _
        %s721 = sand.u32 %s40, 1
        %s722 = scalar_lea.sflag [#allocation5], %s721
        %s723 = sand.u32 %s253, 1
        %s724 = scalar_lea.vmem [#allocation4], %s723
        // Predicated region
        $region93: #{transformer_forward.2} parent=87 // pred_check
          %p725 = pneg %p266
        $region94: #{transformer_forward.2} parent=87 // pred_check_branch
          %727 = sbr.rel (%p725) target = $region96
        $region95: #{transformer_forward.2} parent=87 // pred_region
          %729 = dma.done %s722, 16
        $region96: #{transformer_forward.2} parent=87 // pred_fallthru
          _
        %s730 = sand.u32 %s40, 1
        %s731 = scalar_lea.sflag [#allocation5], %s730
        %s732 = sand.u32 %s305, 1
        %s733 = scalar_lea.vmem [#allocation6], %s732
        // Predicated region
        $region97: #{transformer_forward.2} parent=87 // pred_check
          %p734 = pneg %p318
        $region98: #{transformer_forward.2} parent=87 // pred_check_branch
          %736 = sbr.rel (%p734) target = $region100
        $region99: #{transformer_forward.2} parent=87 // pred_region
          %738 = dma.done %s731, 16
        $region100: #{transformer_forward.2} parent=87 // pred_fallthru
          _
        %s739 = sand.u32 %s40, 1
        %s740 = scalar_lea.sflag [#allocation8], %s739
        %s741 = sand.u32 %s383, 1
        %s742 = smul.addr %s741, 16
        %s743 = scalar_lea.vmem [#allocation7], %s742
        // Predicated region
        $region101: #{transformer_forward.2} parent=87 // pred_check
          %p744 = pneg %p396
        $region102: #{transformer_forward.2} parent=87 // pred_check_branch
          %746 = sbr.rel (%p744) target = $region104
        $region103: #{transformer_forward.2} parent=87 // pred_region
          %748 = dma.done %s740, 256
        $region104: #{transformer_forward.2} parent=87 // pred_fallthru
          _
        %s749 = sand.u32 %s40, 1
        %s750 = scalar_lea.sflag [#allocation8], %s749
        %s751 = sand.u32 %s409, 1
        %s752 = scalar_lea.vmem [#allocation9], %s751
        // Predicated region
        $region105: #{transformer_forward.2} parent=87 // pred_check
          %p753 = pneg %p422
        $region106: #{transformer_forward.2} parent=87 // pred_check_branch
          %755 = sbr.rel (%p753) target = $region108
        $region107: #{transformer_forward.2} parent=87 // pred_region
          %757 = dma.done %s750, 16
        $region108: #{transformer_forward.2} parent=87 // pred_fallthru
          _
        %s758 = sand.u32 %s40, 1
        %s759 = scalar_lea.sflag [#allocation11], %s758
        %s760 = sand.u32 %s435, 1
        %s761 = scalar_lea.vmem [#allocation10], %s760
        // Predicated region
        $region109: #{transformer_forward.2} parent=87 // pred_check
          %p762 = pneg %p448
        $region110: #{transformer_forward.2} parent=87 // pred_check_branch
          %764 = sbr.rel (%p762) target = $region112
        $region111: #{transformer_forward.2} parent=87 // pred_region
          %766 = dma.done %s759, 16
        $region112: #{transformer_forward.2} parent=87 // pred_fallthru
          _
        %s767 = sand.u32 %s40, 1
        %s768 = scalar_lea.sflag [#allocation11], %s767
        %s769 = sand.u32 %s461, 1
        %s770 = scalar_lea.vmem [#allocation12], %s769
        // Predicated region
        $region113: #{transformer_forward.2} parent=87 // pred_check
          %p771 = pneg %p474
        $region114: #{transformer_forward.2} parent=87 // pred_check_branch
          %773 = sbr.rel (%p771) target = $region116
        $region115: #{transformer_forward.2} parent=87 // pred_region
          %775 = dma.done %s768, 16
        $region116: #{transformer_forward.2} parent=87 // pred_fallthru
          _
        %p776 = scmp.lt.s32.totalorder %s44, 1
        %s777 = scalar_select %p776, %s44, 1
        %s778 = smul.addr %s777, 8
        %s779 = scalar_lea.vmem %s0, %s778
        %p780 = pneg %p73
        %p781 = pneg %p70
        %p782 = pneg %p94
        %p783 = pneg %p91
        %p784 = pneg %p115
        %p785 = pneg %p112
        %p786 = pneg %p136
        %p787 = pneg %p133
        %p788 = scmp.lt.s32.totalorder %s44, 1
        %s789 = scalar_select %p788, %s44, 1
        %s790 = scalar_lea.vmem %s4, %s789
        %p791 = pneg %p162
        %p792 = pneg %p159
        %p793 = scmp.lt.s32.totalorder %s45, 2
        %s794 = scalar_select %p793, %s45, 2
        %s795 = smul.addr %s794, 4
        %s796 = smul.addr %s795, 4
        %s797 = scalar_lea.vmem %s5, %s796
        %p798 = pneg %p188
        %p799 = pneg %p185
        %p800 = scmp.lt.s32.totalorder %s45, 2
        %s801 = scalar_select %p800, %s45, 2
        %s802 = scalar_lea.vmem %s6, %s801
        %p803 = pneg %p214
        %p804 = pneg %p211
        %s805 = sand.u32 %s227, 1
        %s806 = scalar_lea.sflag [#allocation3], %s805
        %s807 = sand.u32 %s227, 1
        %s808 = smul.addr %s807, 16
        %s809 = scalar_lea.vmem [#allocation2], %s808
        %p810 = pneg %p240
        %p811 = pneg %p237
        %s812 = sand.u32 %s40, 1
        %s813 = scalar_lea.sflag [#allocation5], %s812
        %s814 = sand.u32 %s253, 1
        %s815 = scalar_lea.vmem [#allocation4], %s814
        %p816 = pneg %p266
        %p817 = pneg %p263
        %p818 = scmp.lt.s32.totalorder %s45, 2
        %s819 = scalar_select %p818, %s45, 2
        %s820 = scalar_lea.vmem %s9, %s819
        %p821 = pneg %p292
        %p822 = pneg %p289
        %s823 = sand.u32 %s40, 1
        %s824 = scalar_lea.sflag [#allocation5], %s823
        %s825 = sand.u32 %s305, 1
        %s826 = scalar_lea.vmem [#allocation6], %s825
        %p827 = pneg %p318
        %p828 = pneg %p315
        %p829 = scmp.lt.s32.totalorder %s45, 2
        %s830 = scalar_select %p829, %s45, 2
        %s831 = smul.addr %s830, 4
        %s832 = smul.addr %s831, 4
        %s833 = scalar_lea.vmem %s11, %s832
        %p834 = pneg %p344
        %p835 = pneg %p341
        %p836 = scmp.lt.s32.totalorder %s45, 2
        %s837 = scalar_select %p836, %s45, 2
        %s838 = scalar_lea.vmem %s12, %s837
        %p839 = pneg %p370
        %p840 = pneg %p367
        %s841 = sand.u32 %s40, 1
        %s842 = scalar_lea.sflag [#allocation8], %s841
        %s843 = sand.u32 %s383, 1
        %s844 = smul.addr %s843, 16
        %s845 = scalar_lea.vmem [#allocation7], %s844
        %p846 = pneg %p396
        %p847 = pneg %p393
        %s848 = sand.u32 %s40, 1
        %s849 = scalar_lea.sflag [#allocation8], %s848
        %s850 = sand.u32 %s409, 1
        %s851 = scalar_lea.vmem [#allocation9], %s850
        %p852 = pneg %p422
        %p853 = pneg %p419
        %s854 = sand.u32 %s40, 1
        %s855 = scalar_lea.sflag [#allocation11], %s854
        %s856 = sand.u32 %s435, 1
        %s857 = scalar_lea.vmem [#allocation10], %s856
        %p858 = pneg %p448
        %p859 = pneg %p445
        %s860 = sand.u32 %s40, 1
        %s861 = scalar_lea.sflag [#allocation11], %s860
        %s862 = sand.u32 %s461, 1
        %s863 = scalar_lea.vmem [#allocation12], %s862
        %p864 = pneg %p474
        %p865 = pneg %p471
        %p866 = pneg %p500
        %p867 = pneg %p497
        %p868 = scmp.lt.s32.totalorder %s44, 1
        %s869 = scalar_select %p868, %s44, 1
        %s870 = smul.addr %s869, 8
        %s871 = scalar_lea.vmem %s17, %s870
        %p872 = scmp.lt.s32.totalorder %s44, 1
        %s873 = scalar_select %p872, %s44, 1
        %s874 = smul.addr %s873, 8
        %s875 = scalar_lea.vmem %s0, %s874
        %p876 = scmp.lt.s32.totalorder %s44, 1
        %s877 = scalar_select %p876, %s44, 1
        %s878 = scalar_lea.vmem %s4, %s877
        %p879 = scmp.lt.s32.totalorder %s45, 2
        %s880 = scalar_select %p879, %s45, 2
        %s881 = smul.addr %s880, 4
        %s882 = smul.addr %s881, 4
        %s883 = scalar_lea.vmem %s5, %s882
        %p884 = scmp.lt.s32.totalorder %s45, 2
        %s885 = scalar_select %p884, %s45, 2
        %s886 = scalar_lea.vmem %s6, %s885
        %p887 = scmp.lt.s32.totalorder %s45, 2
        %s888 = scalar_select %p887, %s45, 2
        %s889 = scalar_lea.vmem %s9, %s888
        %p890 = scmp.lt.s32.totalorder %s45, 2
        %s891 = scalar_select %p890, %s45, 2
        %s892 = smul.addr %s891, 4
        %s893 = smul.addr %s892, 4
        %s894 = scalar_lea.vmem %s11, %s893
        %p895 = scmp.lt.s32.totalorder %s45, 2
        %s896 = scalar_select %p895, %s45, 2
        %s897 = scalar_lea.vmem %s12, %s896
        %p898 = scmp.lt.s32.totalorder %s44, 1
        %s899 = scalar_select %p898, %s44, 1
        %s900 = smul.addr %s899, 8
        %s901 = scalar_lea.vmem %s17, %s900
        %p903 = scmp.eq.s32.totalorder %s45, 0
        // Predicated region
        $region117: #{transformer_forward.2} parent=87 // pred_check
          %p904 = pneg %p903
        $region118: #{transformer_forward.2} parent=87 // pred_check_branch
          %906 = sbr.rel (%p904) target = $region120
        $region119: #{transformer_forward.2} parent=87 // pred_region
          %v907 = vld [vmem:[%s875] sm:$0xff]
          %v908 = vpack.c.bf16 %v907, %v907
          %v909 = vld [vmem:[%s2] sm:$0xf]
          %v910 = vld [vmem:[%s3] sm:$0x1]
          %v912 = vperm.slane %v910, 0
          %vm914 = vcmask 64512
          %v916 = vsel %vm914, %v908, 0
          %vm918 = vcmask 1043456
          %v920 = vsel %vm918, %v909, 0
          %922 = vmatpush.bf16.msra.mxu0 0
          %923 = vmatpush.bf16.msra.mxu0 0
          %924 = vmatpush.bf16.msra.mxu0 0
          %925 = vmatpush.bf16.msra.mxu0 0
          %926 = vmatpush.bf16.msra.mxu0 0
          %927 = vmatpush.bf16.msra.mxu0 0
          %928 = vmatpush.bf16.msra.mxu0 0
          %929 = vmatpush.bf16.msra.mxu0 %v920
          %930 = vmatmul.bf16.gmra.mxu0 %v916
          %v931 = vpop.f32.mrf.mxu0
          %v932 = vadd.f32 %v912, %v931
          %v933 = vpop.f32.mrf.mxu0
          %934 = vdwg.mxu0
          %v935 = vmax.f32 %v932, 0.0
          %v936 = vld [vmem:[%s1] sm:$0xff]
          %v937 = vadd.f32 %v935, %v936
          %vm938 = vcmask 261120
          %939 = vst.msk [vmem:[%s901] sm:$0xff] %vm938, %v937
        $region120: #{transformer_forward.2} parent=87 // pred_fallthru
          _
        %v940 = vld [vmem:[%s901] sm:$0xff]
        %v941 = vpack.c.bf16 %v940, %v940
        %v942 = vld [vmem:[%s883] sm:$0xf]
        %v943 = vld [vmem:[%s883 + $0x4] sm:$0xf]
        %v944 = vld [vmem:[%s883 + $0x8] sm:$0xf]
        %v945 = vld [vmem:[%s883 + $0xc] sm:$0xf]
        %v946 = vld [vmem:[%s886] sm:$0x1]
        %v948 = vperm.slane %v946, 0
        %v954 = vunpack.c.l.b16 %v942
        %v955 = vunpack.c.l.b16 %v943
        %v956 = vunpack.c.l.b16 %v944
        %v957 = vunpack.c.l.b16 %v945
        %v958 = vpack.c.b16 %v955, %v954
        %v959 = vpack.c.b16 %v957, %v956
        %vm962 = vcmask 261120
        %v964 = vsel %vm962, %v941, 0
        %966 = vmatpush.bf16.msra.mxu0 0
        %967 = vmatpush.bf16.msra.mxu0 0
        %968 = vmatpush.bf16.msra.mxu0 0
        %969 = vmatpush.bf16.msra.mxu0 0
        %970 = vmatpush.bf16.msra.mxu0 0
        %971 = vmatpush.bf16.msra.mxu0 0
        %972 = vmatpush.bf16.msra.mxu0 %v959
        %973 = vmatpush.bf16.msra.mxu0 %v958
        %974 = vmatmul.bf16.gmra.mxu0 %v964
        %v975 = vpop.f32.mrf.mxu0
        %v976 = vadd.f32 %v948, %v975
        %v977 = vpop.f32.mrf.mxu0
        %978 = vdwg.mxu0
        %v979 = vld [vmem:[%s878] sm:$0x1]
        %v981 = vperm.slane %v979, 0
        %v983 = vpack.c.bf16 %v976, %v976
        %v985 = vunpack.c.l.b16 %v983
        %v986 = vpack.c.b16 %v985, %v985
        %987 = vrot.lane.b32.xlu0 %v986, 96
        %v988 = vpop.permute.xlu0 %987
        %vm989 = vcmask 130048
        %v991 = vsel %vm989, %v983, 0
        %v994 = vsel %vm989, %v988, 0
        %996 = vmatpush.bf16.xpose.msra.mxu0 0
        %997 = vmatpush.bf16.xpose.msra.mxu0 0
        %998 = vmatpush.bf16.xpose.msra.mxu0 0
        %999 = vmatpush.bf16.xpose.msra.mxu0 0
        %1000 = vmatpush.bf16.xpose.msra.mxu0 0
        %1001 = vmatpush.bf16.xpose.msra.mxu0 0
        %1002 = vmatpush.bf16.xpose.msra.mxu0 0
        %1003 = vmatpush.bf16.xpose.msra.mxu0 %v994
        %1004 = vmatmul.bf16.gmra.mxu0 %v991
        %v1005 = vpop.f32.mrf.mxu0
        %v1006 = vadd.f32 0.0, %v1005
        %v1007 = vpop.f32.mrf.mxu0
        %1008 = vdwg.mxu0
        %v1009 = vmul.f32 %v1006, 0.25
        %v1010 = vadd.f32 %v1009, %v981
        %vm1011 = vcmask 64512
        %v1012 = vsel %vm1011, %v1010, -inf
        %1013 = vmax.xlane.f32.xlu0 %v1012
        %v1014 = vpop.xlane.xlu0 %1013
        %v1015 = vsub.f32 %v1010, %v1014
        %v1016 = vmul.f32 %v1015, 1.442695
        %v1017 = vpow.pop %v1016
        %v1018 = vsel %vm1011, %v1017, 0.0
        %1019 = vadd.xlane.f32.xlu0 %v1018
        %v1020 = vpop.xlane.xlu0 %1019
        %v1021 = vrcp.pop %v1020
        %v1022 = vmul.f32 %v1017, %v1021
        %v1023 = vpack.c.bf16 %v1022, %v1022
        %1024 = vrot.lane.b32.xlu0 %v986, 64
        %v1025 = vpop.permute.xlu0 %1024
        %v1027 = vsel %vm1011, %v1023, 0
        %vm1029 = vcmask 1043456
        %v1031 = vsel %vm1029, %v1025, 0
        %1033 = vmatpush.bf16.msra.mxu0 0
        %1034 = vmatpush.bf16.msra.mxu0 0
        %1035 = vmatpush.bf16.msra.mxu0 0
        %1036 = vmatpush.bf16.msra.mxu0 0
        %1037 = vmatpush.bf16.msra.mxu0 0
        %1038 = vmatpush.bf16.msra.mxu0 0
        %1039 = vmatpush.bf16.msra.mxu0 0
        %1040 = vmatpush.bf16.msra.mxu0 %v1031
        %1041 = vmatmul.bf16.gmra.mxu0 %v1027
        %v1042 = vpop.f32.mrf.mxu0
        %v1043 = vadd.f32 0.0, %v1042
        %v1044 = vpop.f32.mrf.mxu0
        %1045 = vdwg.mxu0
        %1046 = vrot.lane.b32.xlu0 %v986, 112
        %v1047 = vpop.permute.xlu0 %1046
        %1048 = vrot.lane.b32.xlu0 %v986, 80
        %v1049 = vpop.permute.xlu0 %1048
        %v1051 = vsel %vm989, %v1047, 0
        %v1054 = vsel %vm989, %v1049, 0
        %1056 = vmatpush.bf16.xpose.msra.mxu0 0
        %1057 = vmatpush.bf16.xpose.msra.mxu0 0
        %1058 = vmatpush.bf16.xpose.msra.mxu0 0
        %1059 = vmatpush.bf16.xpose.msra.mxu0 0
        %1060 = vmatpush.bf16.xpose.msra.mxu0 0
        %1061 = vmatpush.bf16.xpose.msra.mxu0 0
        %1062 = vmatpush.bf16.xpose.msra.mxu0 0
        %1063 = vmatpush.bf16.xpose.msra.mxu0 %v1054
        %1064 = vmatmul.bf16.gmra.mxu0 %v1051
        %v1065 = vpop.f32.mrf.mxu0
        %v1066 = vadd.f32 0.0, %v1065
        %v1067 = vpop.f32.mrf.mxu0
        %1068 = vdwg.mxu0
        %v1069 = vmul.f32 %v1066, 0.25
        %v1070 = vadd.f32 %v1069, %v981
        %v1071 = vsel %vm1011, %v1070, -inf
        %1072 = vmax.xlane.f32.xlu0 %v1071
        %v1073 = vpop.xlane.xlu0 %1072
        %v1074 = vsub.f32 %v1070, %v1073
        %v1075 = vmul.f32 %v1074, 1.442695
        %v1076 = vpow.pop %v1075
        %v1077 = vsel %vm1011, %v1076, 0.0
        %1078 = vadd.xlane.f32.xlu0 %v1077
        %v1079 = vpop.xlane.xlu0 %1078
        %v1080 = vrcp.pop %v1079
        %v1081 = vmul.f32 %v1076, %v1080
        %v1082 = vpack.c.bf16 %v1081, %v1081
        %1083 = vrot.lane.b32.xlu0 %v986, 48
        %v1084 = vpop.permute.xlu0 %1083
        %v1086 = vsel %vm1011, %v1082, 0
        %v1089 = vsel %vm1029, %v1084, 0
        %1091 = vmatpush.bf16.msra.mxu0 0
        %1092 = vmatpush.bf16.msra.mxu0 0
        %1093 = vmatpush.bf16.msra.mxu0 0
        %1094 = vmatpush.bf16.msra.mxu0 0
        %1095 = vmatpush.bf16.msra.mxu0 0
        %1096 = vmatpush.bf16.msra.mxu0 0
        %1097 = vmatpush.bf16.msra.mxu0 0
        %1098 = vmatpush.bf16.msra.mxu0 %v1089
        %1099 = vmatmul.bf16.gmra.mxu0 %v1086
        %v1100 = vpop.f32.mrf.mxu0
        %v1101 = vadd.f32 0.0, %v1100
        %v1102 = vpop.f32.mrf.mxu0
        %1103 = vdwg.mxu0
        %1105 = vrot.lane.b32.xlu0 %v1101, 16
        %v1106 = vpop.permute.xlu0 %1105
        %v1108 = vsel %vm989, %v1043, %v1106
        %v1109 = vpack.c.bf16 %v1108, %v1108
        %v1110 = vld [vmem:[%s715] sm:$0xf]
        %v1111 = vld [vmem:[%s715 + $0x4] sm:$0xf]
        %v1112 = vld [vmem:[%s715 + $0x8] sm:$0xf]
        %v1113 = vld [vmem:[%s715 + $0xc] sm:$0xf]
        %v1114 = vld [vmem:[%s724] sm:$0x1]
        %v1116 = vperm.slane %v1114, 0
        %v1122 = vunpack.c.l.b16 %v1110
        %v1123 = vunpack.c.l.b16 %v1111
        %v1124 = vunpack.c.l.b16 %v1112
        %v1125 = vunpack.c.l.b16 %v1113
        %v1126 = vpack.c.b16 %v1123, %v1122
        %v1127 = vpack.c.b16 %v1125, %v1124
        %v1131 = vsel %vm962, %v1109, 0
        %1133 = vmatpush.bf16.msra.mxu0 0
        %1134 = vmatpush.bf16.msra.mxu0 0
        %1135 = vmatpush.bf16.msra.mxu0 0
        %1136 = vmatpush.bf16.msra.mxu0 0
        %1137 = vmatpush.bf16.msra.mxu0 0
        %1138 = vmatpush.bf16.msra.mxu0 0
        %1139 = vmatpush.bf16.msra.mxu0 %v1127
        %1140 = vmatpush.bf16.msra.mxu0 %v1126
        %1141 = vmatmul.bf16.gmra.mxu0 %v1131
        %v1142 = vpop.f32.mrf.mxu0
        %v1143 = vadd.f32 %v1116, %v1142
        %v1144 = vpop.f32.mrf.mxu0
        %1145 = vdwg.mxu0
        %v1146 = vadd.f32 %v940, %v1143
        %v1147 = vsel %vm962, %v1146, 0.0
        %1148 = vadd.xlane.f32.xlu0 %v1147
        %v1149 = vpop.xlane.xlu0 %1148
        %v1150 = vrcp.pop 32.0
        %v1151 = vmul.f32 32.0, %v1150
        %v1152 = vsub.f32 1.0, %v1151
        %v1153 = vmul.f32 %v1150, %v1152
        %v1154 = vadd.f32 %v1150, %v1153
        %vm1155 = vweird.f32 %v1150
        %v1156 = vsel %vm1155, %v1150, %v1154
        %v1157 = vmul.f32 %v1149, %v1156
        %v1158 = vsub.f32 %v1146, %v1157
        %v1159 = vmul.f32 %v1158, %v1158
        %v1160 = vsel %vm962, %v1159, 0.0
        %1161 = vadd.xlane.f32.xlu0 %v1160
        %v1162 = vpop.xlane.xlu0 %1161
        %v1163 = vmul.f32 %v1162, %v1156
        %v1164 = vadd.f32 %v1163, 1e-05
        %v1165 = vrsqrt.pop %v1164
        %v1166 = vmul.f32 %v1165, %v1164
        %v1167 = vmul.f32 %v1166, %v1165
        %v1168 = vmul.f32 0.5, %v1167
        %v1169 = vsub.f32 1.5, %v1168
        %v1170 = vmul.f32 %v1165, %v1169
        %vm1171 = vweird.f32 %v1164
        %vm1172 = vweird.f32 %v1165
        %vm1173 = vmor %vm1171, %vm1172
        %v1174 = vsel %vm1173, %v1165, %v1170
        %v1175 = vmul.f32 %v1158, %v1174
        %v1176 = vld [vmem:[%s889] sm:$0x1]
        %v1178 = vperm.slane %v1176, 0
        %v1180 = vmul.f32 %v1175, %v1178
        %v1181 = vld [vmem:[%s733] sm:$0x1]
        %v1183 = vperm.slane %v1181, 0
        %v1185 = vadd.f32 %v1180, %v1183
        %v1186 = vpack.c.bf16 %v1185, %v1185
        %v1187 = vld [vmem:[%s894] sm:$0xf]
        %v1188 = vld [vmem:[%s894 + $0x4] sm:$0xf]
        %v1189 = vld [vmem:[%s894 + $0x8] sm:$0xf]
        %v1190 = vld [vmem:[%s894 + $0xc] sm:$0xf]
        %v1191 = vld [vmem:[%s897] sm:$0x1]
        %v1193 = vperm.slane %v1191, 0
        %v1199 = vunpack.c.l.b16 %v1187
        %v1200 = vunpack.c.l.b16 %v1188
        %v1201 = vunpack.c.l.b16 %v1189
        %v1202 = vunpack.c.l.b16 %v1190
        %v1203 = vpack.c.b16 %v1200, %v1199
        %v1204 = vpack.c.b16 %v1202, %v1201
        %v1208 = vsel %vm962, %v1186, 0
        %1210 = vmatpush.bf16.msra.mxu0 0
        %1211 = vmatpush.bf16.msra.mxu0 0
        %1212 = vmatpush.bf16.msra.mxu0 0
        %1213 = vmatpush.bf16.msra.mxu0 0
        %1214 = vmatpush.bf16.msra.mxu0 0
        %1215 = vmatpush.bf16.msra.mxu0 0
        %1216 = vmatpush.bf16.msra.mxu0 %v1204
        %1217 = vmatpush.bf16.msra.mxu0 %v1203
        %1218 = vmatmul.bf16.gmra.mxu0 %v1208
        %v1219 = vpop.f32.mrf.mxu0
        %v1220 = vadd.f32 %v1193, %v1219
        %v1221 = vpop.f32.mrf.mxu0
        %1222 = vdwg.mxu0
        %v1223 = vmax.f32 %v1220, 0.0
        %v1224 = vpack.c.bf16 %v1223, %v1223
        %v1225 = vld [vmem:[%s743] sm:$0xf]
        %v1226 = vld [vmem:[%s743 + $0x4] sm:$0xf]
        %v1227 = vld [vmem:[%s743 + $0x8] sm:$0xf]
        %v1228 = vld [vmem:[%s743 + $0xc] sm:$0xf]
        %v1229 = vld [vmem:[%s752] sm:$0x1]
        %v1231 = vperm.slane %v1229, 0
        %v1237 = vunpack.c.l.b16 %v1225
        %v1238 = vunpack.c.l.b16 %v1226
        %v1239 = vunpack.c.l.b16 %v1227
        %v1240 = vunpack.c.l.b16 %v1228
        %v1241 = vpack.c.b16 %v1238, %v1237
        %v1242 = vpack.c.b16 %v1240, %v1239
        %v1246 = vsel %vm962, %v1224, 0
        %1248 = vmatpush.bf16.msra.mxu0 0
        %1249 = vmatpush.bf16.msra.mxu0 0
        %1250 = vmatpush.bf16.msra.mxu0 0
        %1251 = vmatpush.bf16.msra.mxu0 0
        %1252 = vmatpush.bf16.msra.mxu0 0
        %1253 = vmatpush.bf16.msra.mxu0 0
        %1254 = vmatpush.bf16.msra.mxu0 %v1242
        %1255 = vmatpush.bf16.msra.mxu0 %v1241
        %1256 = vmatmul.bf16.gmra.mxu0 %v1246
        %v1257 = vpop.f32.mrf.mxu0
        %v1258 = vadd.f32 %v1231, %v1257
        %v1259 = vpop.f32.mrf.mxu0
        %1260 = vdwg.mxu0
        %v1261 = vadd.f32 %v1185, %v1258
        %v1262 = vsel %vm962, %v1261, 0.0
        %1263 = vadd.xlane.f32.xlu0 %v1262
        %v1264 = vpop.xlane.xlu0 %1263
        %v1265 = vmul.f32 %v1264, %v1156
        %v1266 = vsub.f32 %v1261, %v1265
        %v1267 = vmul.f32 %v1266, %v1266
        %v1268 = vsel %vm962, %v1267, 0.0
        %1269 = vadd.xlane.f32.xlu0 %v1268
        %v1270 = vpop.xlane.xlu0 %1269
        %v1271 = vmul.f32 %v1270, %v1156
        %v1272 = vadd.f32 %v1271, 1e-05
        %v1273 = vrsqrt.pop %v1272
        %v1274 = vmul.f32 %v1273, %v1272
        %v1275 = vmul.f32 %v1274, %v1273
        %v1276 = vmul.f32 0.5, %v1275
        %v1277 = vsub.f32 1.5, %v1276
        %v1278 = vmul.f32 %v1273, %v1277
        %vm1279 = vweird.f32 %v1272
        %vm1280 = vweird.f32 %v1273
        %vm1281 = vmor %vm1279, %vm1280
        %v1282 = vsel %vm1281, %v1273, %v1278
        %v1283 = vmul.f32 %v1266, %v1282
        %v1284 = vld [vmem:[%s761] sm:$0x1]
        %v1286 = vperm.slane %v1284, 0
        %v1288 = vmul.f32 %v1283, %v1286
        %v1289 = vld [vmem:[%s770] sm:$0x1]
        %v1291 = vperm.slane %v1289, 0
        %v1293 = vadd.f32 %v1288, %v1291
        %1294 = vst.msk [vmem:[%s901] sm:$0xff] %vm962, %v1293
        %p1295 = scmp.lt.s32.totalorder %s44, 1
        %s1296 = scalar_select %p1295, %s44, 1
        %s1297 = smul.addr %s1296, 8
        %s1298 = scalar_lea.vmem %s17, %s1297
        // Predicated region
        $region121: #{transformer_forward.2} parent=87 // pred_check
          %p1299 = pneg %p497
        $region122: #{transformer_forward.2} parent=87 // pred_check_branch
          %1301 = sbr.rel (%p1299) target = $region124
        $region123: #{transformer_forward.2} parent=87 // pred_region
          _
        $region124: #{transformer_forward.2} parent=87 // pred_fallthru
          _
      $region88: #{transformer_forward.2} parent=5 // pred_fallthru
        _
      %p1302 = scmp.le.s32.totalorder 2, %s35
      // Predicated region
      $region125: #{transformer_forward.2} parent=5 // pred_check
        %p1303 = pneg %p1302
      $region126: #{transformer_forward.2} parent=5 // pred_check_branch
        %1305 = sbr.rel (%p1303) target = $region128
      $region127: #{transformer_forward.2} parent=5 // pred_region
        %s1306 = ssub.s32 %s35, 2
        // Predicated region
        $region129: #{transformer_forward.2} parent=127 // pred_check
          %p1307 = pneg %p503
        $region130: #{transformer_forward.2} parent=127 // pred_check_branch
          %1309 = sbr.rel (%p1307) target = $region132
        $region131: #{transformer_forward.2} parent=127 // pred_region
          %p1310 = scmp.lt.s32.totalorder %s46, 1
          %s1311 = scalar_select %p1310, %s46, 1
          %s1312 = smul.addr %s1311, 8
          %s1313 = scalar_lea.vmem %s17, %s1312
        $region132: #{transformer_forward.2} parent=127 // pred_fallthru
          _
      $region128: #{transformer_forward.2} parent=5 // pred_fallthru
        _
    $region6: #{transformer_forward.2} parent=1 // loop_footer
      %s39 = sadd.s32 1, %s35
    $region7: #{transformer_forward.2} parent=1 // loop_footer_branch
      %34 = sbr.rel target = $region3
    $region8: #{transformer_forward.2} parent=1 // loop_exit
      _
    %1314 = vsyncpa [#allocation3], 1
    %s1315 = scalar_lea.sflag [#allocation3], 1
    %1316 = vsyncpa %s1315, 1
    %1317 = vsyncpa [#allocation5], 1
    %s1318 = scalar_lea.sflag [#allocation5], 1
    %1319 = vsyncpa %s1318, 1
    %1320 = vsyncpa [#allocation8], 1
    %s1321 = scalar_lea.sflag [#allocation8], 1
    %1322 = vsyncpa %s1321, 1
    %1323 = vsyncpa [#allocation11], 1
    %s1324 = scalar_lea.sflag [#allocation11], 1
    %1325 = vsyncpa %s1324, 1

</llo_original>
